<compile_context>
chip_gen: v5e
topology: v5e:2x2
jax: 0.10.0
libtpu: 0.0.40
codegen_flags: <defaults>
</compile_context>

<pallas_src>
import math
from functools import partial

import numpy as np
import jax
import jax.numpy as jnp
from jax.experimental import pallas as pl
from jax.experimental.pallas import tpu as pltpu

LOG_EPS = 1e-3        # LogTransform: log(x + clip)
BN_EPS = 1e-5         # BatchNorm eps
LN_EPS = 1e-5         # LayerNorm eps
LEAKY_SLOPE = 0.01    # nn.LeakyReLU default negative_slope


def _round_up(x, m):
    return ((x + m - 1) // m) * m


def _hz_to_mel_htk(f):
    return 2595.0 * np.log10(1.0 + f / 700.0)


def _mel_to_hz_htk(m):
    return 700.0 * (10.0 ** (m / 2595.0) - 1.0)


def _const_spec(shape):
    nd = len(shape)
    return pl.BlockSpec(shape, lambda b, i, _nd=nd: (0,) * _nd)


# ----------------------------------------------------------------------------
# Kernel 1: in-kernel framing (chunk decomposition) + fused windowed-DFT,
#           magnitude, mel filterbank, log, and BN partial sums.
# ----------------------------------------------------------------------------
def _logmel_kernel(chunks_ref, basis_ref, melfb_ref,
                   lm_ref, s1_ref, s2_ref, *, f_pad, hop, r, tm, t_valid):
    i = pl.program_id(1)
    t0 = pl.multiple_of(i * tm, 8)

    # frame t = concat of chunks t..t+r-1  ->  r small matmuls, f32 accumulate.
    spec = None
    for j in range(r):
        chunk = chunks_ref[pl.ds(t0 + j, tm), :].astype(jnp.bfloat16)   # (tm, hop)
        part = jnp.dot(chunk, basis_ref[j * hop:(j + 1) * hop, :],
                       preferred_element_type=jnp.float32)              # (tm, 2*F_PAD)
        spec = part if spec is None else spec + part

    re = spec[:, :f_pad]
    im = spec[:, f_pad:]
    mag = jnp.sqrt(re * re + im * im)                       # power=1.0 -> magnitude
    mel = jnp.dot(mag, melfb_ref[...],
                  preferred_element_type=jnp.float32)       # (tm, M_PAD), f32 matmul
    logmel = jnp.log(mel + LOG_EPS)                         # LogTransform
    lm_ref[...] = logmel.astype(lm_ref.dtype)

    # Per-tile per-column partial sums over the valid (non-padded) frames.
    row = t0 + jax.lax.broadcasted_iota(jnp.int32, (tm, 1), 0)
    lv = jnp.where(row < t_valid, logmel, 0.0)
    s1 = jnp.sum(lv, axis=0, keepdims=True)                 # (1, M_PAD)
    s2 = jnp.sum(lv * lv, axis=0, keepdims=True)
    s1_ref[...] = jnp.broadcast_to(s1, s1_ref.shape)        # lane/sublane dense
    s2_ref[...] = jnp.broadcast_to(s2, s2_ref.shape)


# ----------------------------------------------------------------------------
# Kernel 2: row-tiled MLP: 3 x (Linear -> LayerNorm -> LeakyReLU),
#           Linear head (lane-padded), sigmoid, bf16 writeback.
#           The global batch-norm is pre-folded into w0/b0 in the wrapper.
# ----------------------------------------------------------------------------
def _mlp_kernel(x_ref, w0_ref, w1_ref, w2_ref, wo_ref, vec_ref, bo_ref, o_ref):
    def layer(h, w_ref, k):
        b = vec_ref[3 * k + 0:3 * k + 1, :]                 # bias
        g = vec_ref[3 * k + 1:3 * k + 2, :]                 # LN gamma
        be = vec_ref[3 * k + 2:3 * k + 3, :]                # LN beta
        h = jnp.dot(h, w_ref[...], preferred_element_type=jnp.float32) + b
        m = jnp.mean(h, axis=-1, keepdims=True)
        c = h - m
        v = jnp.mean(c * c, axis=-1, keepdims=True)
        h = c * jax.lax.rsqrt(v + LN_EPS) * g + be
        h = jnp.maximum(h, LEAKY_SLOPE * h)                 # LeakyReLU
        return h.astype(jnp.bfloat16)                       # bf16 into next MXU matmul

    h = layer(x_ref[...], w0_ref, 0)
    h = layer(h, w1_ref, 1)
    h = layer(h, w2_ref, 2)
    y = jnp.dot(h, wo_ref[...], preferred_element_type=jnp.float32) + bo_ref[...]
    o_ref[...] = jax.nn.sigmoid(y).astype(o_ref.dtype)


# ----------------------------------------------------------------------------
# Constants / parameters
# ----------------------------------------------------------------------------
def make_constants(n_fft, n_mels, sample_rate):
    n_freq = n_fft // 2 + 1
    f_pad = _round_up(n_freq, 128)
    m_pad = _round_up(n_mels, 128)

    n = np.arange(n_fft)
    # periodic Hann window (torch.hann_window default), folded into the bases
    window = 0.5 * (1.0 - np.cos(2.0 * np.pi * n / n_fft))
    k = np.arange(n_freq)
    phase = 2.0 * np.pi * np.outer(n, k) / n_fft                  # (n_fft, n_freq)
    basis = np.zeros((n_fft, 2 * f_pad), dtype=np.float32)
    basis[:, :n_freq] = window[:, None] * np.cos(phase)
    basis[:, f_pad:f_pad + n_freq] = window[:, None] * (-np.sin(phase))

    # HTK-scale triangular mel filterbank (htk=True), zero-padded to (F_PAD, M_PAD)
    fmin, fmax = 0.0, sample_rate / 2.0
    mel_pts = np.linspace(_hz_to_mel_htk(fmin), _hz_to_mel_htk(fmax), n_mels + 2)
    hz_pts = _mel_to_hz_htk(mel_pts)
    bin_freqs = np.linspace(0.0, sample_rate / 2.0, n_freq)
    fb = np.zeros((f_pad, m_pad), dtype=np.float32)
    for m in range(n_mels):
        f_l, f_c, f_r = hz_pts[m], hz_pts[m + 1], hz_pts[m + 2]
        lower = (bin_freqs - f_l) / max(f_c - f_l, 1e-8)
        upper = (f_r - bin_freqs) / max(f_r - f_c, 1e-8)
        fb[:n_freq, m] = np.maximum(0.0, np.minimum(lower, upper))

    return (jnp.asarray(basis, dtype=jnp.bfloat16),
            jnp.asarray(fb, dtype=jnp.float32),
            f_pad, m_pad)


def init_params(key, output_dim, n_mels, hidden_size, num_layers):
    assert num_layers == 3, "kernel is written for the default num_layers=3"
    params = []
    dims = [n_mels] + [hidden_size] * num_layers
    keys = jax.random.split(key, num_layers + 1)
    for i in range(num_layers):
        fan_in = dims[i]
        bound = 1.0 / math.sqrt(fan_in)
        kw, kb = jax.random.split(keys[i])
        w = jax.random.uniform(kw, (dims[i], dims[i + 1]), jnp.float32, -bound, bound)
        b = jax.random.uniform(kb, (1, dims[i + 1]), jnp.float32, -bound, bound)
        g = jnp.ones((1, dims[i + 1]), jnp.float32)            # LayerNorm gamma
        be = jnp.zeros((1, dims[i + 1]), jnp.float32)          # LayerNorm beta
        params += [w, b, g, be]
    bound = 1.0 / math.sqrt(hidden_size)
    kw, kb = jax.random.split(keys[-1])
    wo = jax.random.uniform(kw, (hidden_size, output_dim), jnp.float32, -bound, bound)
    bo = jax.random.uniform(kb, (1, output_dim), jnp.float32, -bound, bound)
    params += [wo, bo]
    return params


# ----------------------------------------------------------------------------
# Wrapper / glue
# ----------------------------------------------------------------------------
def mel_mlp_estimator(audio, params, *, output_dim, n_mels, n_fft, hop, sample_rate,
                      num_layers=3, hidden_size=256):
    assert num_layers == 3, "kernel is written for the default num_layers=3"
    B, L = audio.shape
    H = hidden_size
    basis, melfb, F_PAD, M_PAD = make_constants(n_fft, n_mels, sample_rate)
    O_PAD = _round_up(output_dim, 128)

    # ---- glue: center=True reflect padding + hop-chunking (no frame gather) ----
    pad = n_fft // 2
    padded = jnp.pad(audio.astype(jnp.float32), ((0, 0), (pad, pad)), mode="reflect")
    T = L // hop + 1
    r = -(-n_fft // hop)                       # chunks per frame
    n_fft_pad = r * hop
    if n_fft_pad > n_fft:                      # zero basis rows cover the overhang
        basis = jnp.pad(basis, ((0, n_fft_pad - n_fft), (0, 0)))

    # Row tiling over frames (per batch element).  Keep >=2 tiles whenever
    # possible so the "parallel" grid axes split across v7x's two TensorCores.
    if T >= 1024:
        TM = 512
    else:
        TM = max(8, _round_up((T + 1) // 2, 8))
    T_pad = _round_up(T, TM)
    num_tiles = T_pad // TM

    # Non-overlapping (hop,)-chunks of the padded audio; frame t = chunks t..t+r-1.
    C_pad = T_pad + r - 1
    need = C_pad * hop
    P = padded.shape[1]
    if need > P:
        padded = jnp.pad(padded, ((0, 0), (0, need - P)))
    chunks = padded[:, :need].reshape(B, C_pad, hop)           # (B, C_pad, hop) f32

    cparams = pltpu.CompilerParams(dimension_semantics=("parallel", "parallel"),
                                   vmem_limit_bytes=32 * 1024 * 1024)

    rows = B * T_pad
    k1_cost = pl.CostEstimate(
        flops=int(2 * rows * (n_fft_pad * 2 * F_PAD + F_PAD * M_PAD)),
        transcendentals=int(rows * (F_PAD + M_PAD)),
        bytes_accessed=int(B * C_pad * hop * 4
                           + n_fft_pad * 2 * F_PAD * 2 + F_PAD * M_PAD * 4
                           + rows * M_PAD * 2
                           + 2 * B * num_tiles * 8 * M_PAD * 4))

    # ---- Pallas kernel 1: row-tiled log-mel + batch-norm partial sums ----
    logmel, psum, psumsq = pl.pallas_call(
        partial(_logmel_kernel, f_pad=F_PAD, hop=hop, r=r, tm=TM, t_valid=T),
        grid=(B, num_tiles),
        in_specs=[pl.BlockSpec((None, C_pad, hop), lambda b, i: (b, 0, 0)),
                  _const_spec((n_fft_pad, 2 * F_PAD)),
                  _const_spec((F_PAD, M_PAD))],
        out_specs=(pl.BlockSpec((None, TM, M_PAD), lambda b, i: (b, i, 0)),
                   pl.BlockSpec((None, 8, M_PAD), lambda b, i: (b, i, 0)),
                   pl.BlockSpec((None, 8, M_PAD), lambda b, i: (b, i, 0))),
        out_shape=(jax.ShapeDtypeStruct((B, T_pad, M_PAD), jnp.bfloat16),
                   jax.ShapeDtypeStruct((B, num_tiles * 8, M_PAD), jnp.float32),
                   jax.ShapeDtypeStruct((B, num_tiles * 8, M_PAD), jnp.float32)),
        compiler_params=cparams,
        cost_estimate=k1_cost,
    )(chunks, basis, melfb)

    # ---- global Normalize2d('batch') statistics (batch stats, gamma=1, beta=0) ----
    # Each 8-row stats block holds identical per-column partial sums -> /8.
    cnt = float(B * T * n_mels)
    s1 = jnp.sum(psum[:, :, :n_mels]) / 8.0
    s2 = jnp.sum(psumsq[:, :, :n_mels]) / 8.0
    mu = s1 / cnt
    var = jnp.maximum(s2 / cnt - mu * mu, 0.0)
    istd = jax.lax.rsqrt(var + BN_EPS)

    # ---- fold normalization into the first Linear; pack small vectors ----
    w0, b0, g0, be0, w1, b1, g1, be1, w2, b2, g2, be2, wo, bo = params
    w0p = jnp.pad(w0, ((0, M_PAD - n_mels), (0, 0)))           # zero rows for padded mels
    w0_eff = (w0p * istd).astype(jnp.bfloat16)
    b0_eff = b0 - (mu * istd) * jnp.sum(w0, axis=0, keepdims=True)
    vecs = jnp.concatenate([b0_eff, g0, be0, b1, g1, be1, b2, g2, be2], axis=0)  # (9, H)
    wo_p = jnp.pad(wo, ((0, 0), (0, O_PAD - output_dim))).astype(jnp.bfloat16)
    bo_p = jnp.pad(bo, ((0, 0), (0, O_PAD - output_dim)))

    k2_cost = pl.CostEstimate(
        flops=int(2 * rows * (M_PAD * H + 2 * H * H + H * O_PAD)),
        transcendentals=int(rows * (3 + O_PAD)),
        bytes_accessed=int(rows * M_PAD * 2 + rows * O_PAD * 2
                           + (M_PAD * H + 2 * H * H + H * O_PAD) * 2
                           + 9 * H * 4 + O_PAD * 4))

    # ---- Pallas kernel 2: row-tiled MLP + head + sigmoid (bf16 writeback) ----
    out = pl.pallas_call(
        _mlp_kernel,
        grid=(B, num_tiles),
        in_specs=[pl.BlockSpec((None, TM, M_PAD), lambda b, i: (b, i, 0)),
                  _const_spec((M_PAD, H)),
                  _const_spec((H, H)),
                  _const_spec((H, H)),
                  _const_spec((H, O_PAD)),
                  _const_spec((9, H)),
                  _const_spec((1, O_PAD))],
        out_specs=pl.BlockSpec((None, TM, O_PAD), lambda b, i: (b, i, 0)),
        out_shape=jax.ShapeDtypeStruct((B, T_pad, O_PAD), jnp.bfloat16),
        compiler_params=cparams,
        cost_estimate=k2_cost,
    )(logmel, w0_eff, w1.astype(jnp.bfloat16), w2.astype(jnp.bfloat16),
      wo_p, vecs, bo_p)

    return out[:, :T, :output_dim].astype(jnp.float32)


if __name__ == "__main__":
    cfg = dict(output_dim=4, n_mels=32, n_fft=128, hop=32, sample_rate=16000,
               num_layers=3, hidden_size=32)
    key = jax.random.PRNGKey(0)
    k_audio, k_params = jax.random.split(key)

    B, L = 2, 256
    audio = 0.1 * jax.random.normal(k_audio, (B, L), dtype=jnp.float32)
    params = init_params(k_params, cfg["output_dim"], cfg["n_mels"],
                         cfg["hidden_size"], cfg["num_layers"])

    fn = jax.jit(partial(mel_mlp_estimator, **cfg))
    out = fn(audio, params)
    out = jax.block_until_ready(out)

    T = L // cfg["hop"] + 1
    assert out.shape == (B, T, cfg["output_dim"]), out.shape
    assert bool(jnp.all(jnp.isfinite(out)))
    assert bool(jnp.all((out >= 0.0) & (out <= 1.0)))   # sigmoid range
    print("KERNEL_OK")
</pallas_src>

<mosaic_0001>
module attributes {stable_mosaic.version = 11 : i64} {
  func.func @_logmel_kernel(%arg0: i32, %arg1: i32, %arg2: memref<1x19x32xf32, #tpu.memory_space<vmem>>, %arg3: memref<128x256xbf16, #tpu.memory_space<vmem>>, %arg4: memref<128x128xf32, #tpu.memory_space<vmem>>, %arg5: memref<1x8x128xbf16, #tpu.memory_space<vmem>>, %arg6: memref<1x8x128xf32, #tpu.memory_space<vmem>>, %arg7: memref<1x8x128xf32, #tpu.memory_space<vmem>>) attributes {dimension_semantics = [#tpu.dimension_semantics<parallel>, #tpu.dimension_semantics<parallel>], iteration_bounds = array<i64: 2, 2>, scalar_prefetch = 0 : i64, scratch_operands = 0 : i64, tpu.core_type = #tpu.core_type<tc>, window_params = [{transform_indices = @transform_0, window_bounds = array<i64: 1, 19, 32>}, {pipeline_mode = #tpu.pipeline_mode<synchronous>, transform_indices = @transform_1, window_bounds = array<i64: 128, 256>}, {pipeline_mode = #tpu.pipeline_mode<synchronous>, transform_indices = @transform_2, window_bounds = array<i64: 128, 128>}, {transform_indices = @transform_3, window_bounds = array<i64: 1, 8, 128>}, {transform_indices = @transform_4, window_bounds = array<i64: 1, 8, 128>}, {transform_indices = @transform_5, window_bounds = array<i64: 1, 8, 128>}]} {
    %c8_i32 = arith.constant 8 : i32
    %0 = arith.muli %arg1, %c8_i32 : i32
    %1 = tpu.assume_multiple %0, 8 : i32
    %c0_i32 = arith.constant 0 : i32
    %2 = arith.addi %1, %c0_i32 : i32
    %c0 = arith.constant 0 : index
    %3 = arith.index_cast %2 : i32 to index
    %c0_0 = arith.constant 0 : index
    %4 = vector.load %arg2[%c0, %3, %c0_0] : memref<1x19x32xf32, #tpu.memory_space<vmem>>, vector<1x8x32xf32>
    %5 = vector.shape_cast %4 : vector<1x8x32xf32> to vector<8x32xf32>
    %6 = arith.truncf %5 : vector<8x32xf32> to vector<8x32xbf16>
    %c0_1 = arith.constant 0 : index
    %c0_2 = arith.constant 0 : index
    %7 = vector.load %arg3[%c0_1, %c0_2] : memref<128x256xbf16, #tpu.memory_space<vmem>>, vector<32x256xbf16>
    %cst = arith.constant dense<0.000000e+00> : vector<8x256xf32>
    %8 = tpu.matmul %6, %7, %cst {dimension_numbers = #tpu.dot_dimension_numbers<[1], [0], [0], [1], [0, 0, 1, 1], [], []>} : vector<8x32xbf16>, vector<32x256xbf16>, vector<8x256xf32> -> vector<8x256xf32>
    %c1_i32 = arith.constant 1 : i32
    %9 = arith.addi %1, %c1_i32 : i32
    %c0_3 = arith.constant 0 : index
    %10 = arith.index_cast %9 : i32 to index
    %c0_4 = arith.constant 0 : index
    %11 = vector.load %arg2[%c0_3, %10, %c0_4] : memref<1x19x32xf32, #tpu.memory_space<vmem>>, vector<1x8x32xf32>
    %12 = vector.shape_cast %11 : vector<1x8x32xf32> to vector<8x32xf32>
    %13 = arith.truncf %12 : vector<8x32xf32> to vector<8x32xbf16>
    %c32 = arith.constant 32 : index
    %c0_5 = arith.constant 0 : index
    %14 = vector.load %arg3[%c32, %c0_5] : memref<128x256xbf16, #tpu.memory_space<vmem>>, vector<32x256xbf16>
    %cst_6 = arith.constant dense<0.000000e+00> : vector<8x256xf32>
    %15 = tpu.matmul %13, %14, %cst_6 {dimension_numbers = #tpu.dot_dimension_numbers<[1], [0], [0], [1], [0, 0, 1, 1], [], []>} : vector<8x32xbf16>, vector<32x256xbf16>, vector<8x256xf32> -> vector<8x256xf32>
    %16 = arith.addf %8, %15 : vector<8x256xf32>
    %c2_i32 = arith.constant 2 : i32
    %17 = arith.addi %1, %c2_i32 : i32
    %c0_7 = arith.constant 0 : index
    %18 = arith.index_cast %17 : i32 to index
    %c0_8 = arith.constant 0 : index
    %19 = vector.load %arg2[%c0_7, %18, %c0_8] : memref<1x19x32xf32, #tpu.memory_space<vmem>>, vector<1x8x32xf32>
    %20 = vector.shape_cast %19 : vector<1x8x32xf32> to vector<8x32xf32>
    %21 = arith.truncf %20 : vector<8x32xf32> to vector<8x32xbf16>
    %c64 = arith.constant 64 : index
    %c0_9 = arith.constant 0 : index
    %22 = vector.load %arg3[%c64, %c0_9] : memref<128x256xbf16, #tpu.memory_space<vmem>>, vector<32x256xbf16>
    %cst_10 = arith.constant dense<0.000000e+00> : vector<8x256xf32>
    %23 = tpu.matmul %21, %22, %cst_10 {dimension_numbers = #tpu.dot_dimension_numbers<[1], [0], [0], [1], [0, 0, 1, 1], [], []>} : vector<8x32xbf16>, vector<32x256xbf16>, vector<8x256xf32> -> vector<8x256xf32>
    %24 = arith.addf %16, %23 : vector<8x256xf32>
    %c3_i32 = arith.constant 3 : i32
    %25 = arith.addi %1, %c3_i32 : i32
    %c0_11 = arith.constant 0 : index
    %26 = arith.index_cast %25 : i32 to index
    %c0_12 = arith.constant 0 : index
    %27 = vector.load %arg2[%c0_11, %26, %c0_12] : memref<1x19x32xf32, #tpu.memory_space<vmem>>, vector<1x8x32xf32>
    %28 = vector.shape_cast %27 : vector<1x8x32xf32> to vector<8x32xf32>
    %29 = arith.truncf %28 : vector<8x32xf32> to vector<8x32xbf16>
    %c96 = arith.constant 96 : index
    %c0_13 = arith.constant 0 : index
    %30 = vector.load %arg3[%c96, %c0_13] : memref<128x256xbf16, #tpu.memory_space<vmem>>, vector<32x256xbf16>
    %cst_14 = arith.constant dense<0.000000e+00> : vector<8x256xf32>
    %31 = tpu.matmul %29, %30, %cst_14 {dimension_numbers = #tpu.dot_dimension_numbers<[1], [0], [0], [1], [0, 0, 1, 1], [], []>} : vector<8x32xbf16>, vector<32x256xbf16>, vector<8x256xf32> -> vector<8x256xf32>
    %32 = arith.addf %24, %31 : vector<8x256xf32>
    %33 = vector.extract_strided_slice %32 {offsets = [0, 0], sizes = [8, 128], strides = [1, 1]} : vector<8x256xf32> to vector<8x128xf32>
    %34 = vector.extract_strided_slice %32 {offsets = [0, 128], sizes = [8, 128], strides = [1, 1]} : vector<8x256xf32> to vector<8x128xf32>
    %35 = arith.mulf %33, %33 : vector<8x128xf32>
    %36 = arith.mulf %34, %34 : vector<8x128xf32>
    %37 = arith.addf %35, %36 : vector<8x128xf32>
    %38 = math.sqrt %37 : vector<8x128xf32>
    %c0_15 = arith.constant 0 : index
    %c0_16 = arith.constant 0 : index
    %39 = vector.load %arg4[%c0_15, %c0_16] : memref<128x128xf32, #tpu.memory_space<vmem>>, vector<128x128xf32>
    %cst_17 = arith.constant dense<0.000000e+00> : vector<8x128xf32>
    %40 = tpu.matmul %38, %39, %cst_17 {dimension_numbers = #tpu.dot_dimension_numbers<[1], [0], [0], [1], [0, 0, 1, 1], [], []>} : vector<8x128xf32>, vector<128x128xf32>, vector<8x128xf32> -> vector<8x128xf32>
    %cst_18 = arith.constant 1.000000e-03 : f32
    %41 = vector.broadcast %cst_18 : f32 to vector<8x128xf32>
    %42 = arith.addf %40, %41 : vector<8x128xf32>
    %43 = math.log %42 : vector<8x128xf32>
    %44 = arith.truncf %43 : vector<8x128xf32> to vector<8x128xbf16>
    %c0_19 = arith.constant 0 : index
    %c0_20 = arith.constant 0 : index
    %c0_21 = arith.constant 0 : index
    %45 = vector.load %arg5[%c0_19, %c0_20, %c0_21] : memref<1x8x128xbf16, #tpu.memory_space<vmem>>, vector<1x8x128xbf16>
    %46 = vector.shape_cast %45 : vector<1x8x128xbf16> to vector<8x128xbf16>
    %47 = vector.shape_cast %44 : vector<8x128xbf16> to vector<1x8x128xbf16>
    tpu.vector_store %arg5[%c0_19, %c0_20, %c0_21], %47 {strides = array<i32>} : memref<1x8x128xbf16, #tpu.memory_space<vmem>>, vector<1x8x128xbf16>,
    %48 = tpu.iota {dimensions = array<i32: 0>} : vector<8x1xi32>
    %49 = vector.broadcast %1 : i32 to vector<8x1xi32>
    %50 = arith.addi %49, %48 : vector<8x1xi32>
    %c9_i32 = arith.constant 9 : i32
    %51 = vector.broadcast %c9_i32 : i32 to vector<8x1xi32>
    %52 = arith.cmpi slt, %50, %51 : vector<8x1xi32>
    %cst_22 = arith.constant 0.000000e+00 : f32
    %53 = vector.shape_cast %52 : vector<8x1xi1> to vector<8x1xi1>
    %54 = vector.broadcast %53 : vector<8x1xi1> to vector<8x128xi1>
    %55 = vector.broadcast %cst_22 : f32 to vector<8x128xf32>
    %56 = arith.select %54, %43, %55 : vector<8x128xi1>, vector<8x128xf32>
    %cst_23 = arith.constant dense<0.000000e+00> : vector<128xf32>
    %57 = vector.multi_reduction <add>, %56, %cst_23 [0] : vector<8x128xf32> to vector<128xf32>
    %58 = vector.shape_cast %57 : vector<128xf32> to vector<1x128xf32>
    %59 = arith.mulf %56, %56 : vector<8x128xf32>
    %cst_24 = arith.constant dense<0.000000e+00> : vector<128xf32>
    %60 = vector.multi_reduction <add>, %59, %cst_24 [0] : vector<8x128xf32> to vector<128xf32>
    %61 = vector.shape_cast %60 : vector<128xf32> to vector<1x128xf32>
    %62 = vector.shape_cast %58 : vector<1x128xf32> to vector<1x128xf32>
    %63 = vector.broadcast %62 : vector<1x128xf32> to vector<8x128xf32>
    %c0_25 = arith.constant 0 : index
    %c0_26 = arith.constant 0 : index
    %c0_27 = arith.constant 0 : index
    %64 = vector.load %arg6[%c0_25, %c0_26, %c0_27] : memref<1x8x128xf32, #tpu.memory_space<vmem>>, vector<1x8x128xf32>
    %65 = vector.shape_cast %64 : vector<1x8x128xf32> to vector<8x128xf32>
    %66 = vector.shape_cast %63 : vector<8x128xf32> to vector<1x8x128xf32>
    tpu.vector_store %arg6[%c0_25, %c0_26, %c0_27], %66 {strides = array<i32>} : memref<1x8x128xf32, #tpu.memory_space<vmem>>, vector<1x8x128xf32>,
    %67 = vector.shape_cast %61 : vector<1x128xf32> to vector<1x128xf32>
    %68 = vector.broadcast %67 : vector<1x128xf32> to vector<8x128xf32>
    %c0_28 = arith.constant 0 : index
    %c0_29 = arith.constant 0 : index
    %c0_30 = arith.constant 0 : index
    %69 = vector.load %arg7[%c0_28, %c0_29, %c0_30] : memref<1x8x128xf32, #tpu.memory_space<vmem>>, vector<1x8x128xf32>
    %70 = vector.shape_cast %69 : vector<1x8x128xf32> to vector<8x128xf32>
    %71 = vector.shape_cast %68 : vector<8x128xf32> to vector<1x8x128xf32>
    tpu.vector_store %arg7[%c0_28, %c0_29, %c0_30], %71 {strides = array<i32>} : memref<1x8x128xf32, #tpu.memory_space<vmem>>, vector<1x8x128xf32>,
    return
  }
  func.func @transform_0(%arg0: i32, %arg1: i32) -> (i32, i32, i32) {
    %c0_i32 = arith.constant 0 : i32
    %c0_i32_0 = arith.constant 0 : i32
    %c0_i32_1 = arith.constant 0 : i32
    return %arg0, %c0_i32, %c0_i32_0 : i32, i32, i32
  }
  func.func @transform_1(%arg0: i32, %arg1: i32) -> (i32, i32) {
    %c0_i32 = arith.constant 0 : i32
    %c0_i32_0 = arith.constant 0 : i32
    %c0_i32_1 = arith.constant 0 : i32
    return %c0_i32, %c0_i32_0 : i32, i32
  }
  func.func @transform_2(%arg0: i32, %arg1: i32) -> (i32, i32) {
    %c0_i32 = arith.constant 0 : i32
    %c0_i32_0 = arith.constant 0 : i32
    %c0_i32_1 = arith.constant 0 : i32
    return %c0_i32, %c0_i32_0 : i32, i32
  }
  func.func @transform_3(%arg0: i32, %arg1: i32) -> (i32, i32, i32) {
    %c0_i32 = arith.constant 0 : i32
    %c0_i32_0 = arith.constant 0 : i32
    return %arg0, %arg1, %c0_i32 : i32, i32, i32
  }
  func.func @transform_4(%arg0: i32, %arg1: i32) -> (i32, i32, i32) {
    %c0_i32 = arith.constant 0 : i32
    %c0_i32_0 = arith.constant 0 : i32
    return %arg0, %arg1, %c0_i32 : i32, i32, i32
  }
  func.func @transform_5(%arg0: i32, %arg1: i32) -> (i32, i32, i32) {
    %c0_i32 = arith.constant 0 : i32
    %c0_i32_0 = arith.constant 0 : i32
    return %arg0, %arg1, %c0_i32 : i32, i32, i32
  }
}

module attributes {stable_mosaic.version = 11 : i64} {
  func.func @_mlp_kernel(%arg0: i32, %arg1: i32, %arg2: memref<1x8x128xbf16, #tpu.memory_space<vmem>>, %arg3: memref<128x32xbf16, #tpu.memory_space<vmem>>, %arg4: memref<32x32xbf16, #tpu.memory_space<vmem>>, %arg5: memref<32x32xbf16, #tpu.memory_space<vmem>>, %arg6: memref<32x128xbf16, #tpu.memory_space<vmem>>, %arg7: memref<9x32xf32, #tpu.memory_space<vmem>>, %arg8: memref<1x128xf32, #tpu.memory_space<vmem>>, %arg9: memref<1x8x128xbf16, #tpu.memory_space<vmem>>) attributes {dimension_semantics = [#tpu.dimension_semantics<parallel>, #tpu.dimension_semantics<parallel>], iteration_bounds = array<i64: 2, 2>, scalar_prefetch = 0 : i64, scratch_operands = 0 : i64, tpu.core_type = #tpu.core_type<tc>, window_params = [{transform_indices = @transform_0, window_bounds = array<i64: 1, 8, 128>}, {pipeline_mode = #tpu.pipeline_mode<synchronous>, transform_indices = @transform_1, window_bounds = array<i64: 128, 32>}, {pipeline_mode = #tpu.pipeline_mode<synchronous>, transform_indices = @transform_2, window_bounds = array<i64: 32, 32>}, {pipeline_mode = #tpu.pipeline_mode<synchronous>, transform_indices = @transform_3, window_bounds = array<i64: 32, 32>}, {pipeline_mode = #tpu.pipeline_mode<synchronous>, transform_indices = @transform_4, window_bounds = array<i64: 32, 128>}, {pipeline_mode = #tpu.pipeline_mode<synchronous>, transform_indices = @transform_5, window_bounds = array<i64: 9, 32>}, {pipeline_mode = #tpu.pipeline_mode<synchronous>, transform_indices = @transform_6, window_bounds = array<i64: 1, 128>}, {transform_indices = @transform_7, window_bounds = array<i64: 1, 8, 128>}]} {
    %c0 = arith.constant 0 : index
    %c0_0 = arith.constant 0 : index
    %c0_1 = arith.constant 0 : index
    %0 = vector.load %arg2[%c0, %c0_0, %c0_1] : memref<1x8x128xbf16, #tpu.memory_space<vmem>>, vector<1x8x128xbf16>
    %1 = vector.shape_cast %0 : vector<1x8x128xbf16> to vector<8x128xbf16>
    %c0_2 = arith.constant 0 : index
    %c0_3 = arith.constant 0 : index
    %2 = vector.load %arg7[%c0_2, %c0_3] : memref<9x32xf32, #tpu.memory_space<vmem>>, vector<1x32xf32>
    %c1 = arith.constant 1 : index
    %c0_4 = arith.constant 0 : index
    %3 = vector.load %arg7[%c1, %c0_4] : memref<9x32xf32, #tpu.memory_space<vmem>>, vector<1x32xf32>
    %c2 = arith.constant 2 : index
    %c0_5 = arith.constant 0 : index
    %4 = vector.load %arg7[%c2, %c0_5] : memref<9x32xf32, #tpu.memory_space<vmem>>, vector<1x32xf32>
    %c0_6 = arith.constant 0 : index
    %c0_7 = arith.constant 0 : index
    %5 = vector.load %arg3[%c0_6, %c0_7] : memref<128x32xbf16, #tpu.memory_space<vmem>>, vector<128x32xbf16>
    %cst = arith.constant dense<0.000000e+00> : vector<8x32xf32>
    %6 = tpu.matmul %1, %5, %cst {dimension_numbers = #tpu.dot_dimension_numbers<[1], [0], [0], [1], [0, 0, 1, 1], [], []>} : vector<8x128xbf16>, vector<128x32xbf16>, vector<8x32xf32> -> vector<8x32xf32>
    %7 = vector.broadcast %2 : vector<1x32xf32> to vector<8x32xf32>
    %8 = arith.addf %6, %7 : vector<8x32xf32>
    %cst_8 = arith.constant dense<0.000000e+00> : vector<8xf32>
    %9 = vector.multi_reduction <add>, %8, %cst_8 [1] : vector<8x32xf32> to vector<8xf32>
    %10 = vector.shape_cast %9 : vector<8xf32> to vector<8x1xf32>
    %cst_9 = arith.constant 3.200000e+01 : f32
    %11 = vector.broadcast %cst_9 : f32 to vector<8x1xf32>
    %12 = arith.divf %10, %11 : vector<8x1xf32>
    %13 = vector.broadcast %12 : vector<8x1xf32> to vector<8x32xf32>
    %14 = arith.subf %8, %13 : vector<8x32xf32>
    %15 = arith.mulf %14, %14 : vector<8x32xf32>
    %cst_10 = arith.constant dense<0.000000e+00> : vector<8xf32>
    %16 = vector.multi_reduction <add>, %15, %cst_10 [1] : vector<8x32xf32> to vector<8xf32>
    %17 = vector.shape_cast %16 : vector<8xf32> to vector<8x1xf32>
    %cst_11 = arith.constant 3.200000e+01 : f32
    %18 = vector.broadcast %cst_11 : f32 to vector<8x1xf32>
    %19 = arith.divf %17, %18 : vector<8x1xf32>
    %cst_12 = arith.constant 9.99999974E-6 : f32
    %20 = vector.broadcast %cst_12 : f32 to vector<8x1xf32>
    %21 = arith.addf %19, %20 : vector<8x1xf32>
    %22 = math.rsqrt %21 : vector<8x1xf32>
    %23 = vector.broadcast %22 : vector<8x1xf32> to vector<8x32xf32>
    %24 = arith.mulf %14, %23 : vector<8x32xf32>
    %25 = vector.broadcast %3 : vector<1x32xf32> to vector<8x32xf32>
    %26 = arith.mulf %24, %25 : vector<8x32xf32>
    %27 = vector.broadcast %4 : vector<1x32xf32> to vector<8x32xf32>
    %28 = arith.addf %26, %27 : vector<8x32xf32>
    %cst_13 = arith.constant 0.00999999977 : f32
    %29 = vector.broadcast %cst_13 : f32 to vector<8x32xf32>
    %30 = arith.mulf %29, %28 : vector<8x32xf32>
    %31 = arith.maximumf %28, %30 : vector<8x32xf32>
    %32 = arith.truncf %31 : vector<8x32xf32> to vector<8x32xbf16>
    %c3 = arith.constant 3 : index
    %c0_14 = arith.constant 0 : index
    %33 = vector.load %arg7[%c3, %c0_14] : memref<9x32xf32, #tpu.memory_space<vmem>>, vector<1x32xf32>
    %c4 = arith.constant 4 : index
    %c0_15 = arith.constant 0 : index
    %34 = vector.load %arg7[%c4, %c0_15] : memref<9x32xf32, #tpu.memory_space<vmem>>, vector<1x32xf32>
    %c5 = arith.constant 5 : index
    %c0_16 = arith.constant 0 : index
    %35 = vector.load %arg7[%c5, %c0_16] : memref<9x32xf32, #tpu.memory_space<vmem>>, vector<1x32xf32>
    %c0_17 = arith.constant 0 : index
    %c0_18 = arith.constant 0 : index
    %36 = vector.load %arg4[%c0_17, %c0_18] : memref<32x32xbf16, #tpu.memory_space<vmem>>, vector<32x32xbf16>
    %cst_19 = arith.constant dense<0.000000e+00> : vector<8x32xf32>
    %37 = tpu.matmul %32, %36, %cst_19 {dimension_numbers = #tpu.dot_dimension_numbers<[1], [0], [0], [1], [0, 0, 1, 1], [], []>} : vector<8x32xbf16>, vector<32x32xbf16>, vector<8x32xf32> -> vector<8x32xf32>
    %38 = vector.broadcast %33 : vector<1x32xf32> to vector<8x32xf32>
    %39 = arith.addf %37, %38 : vector<8x32xf32>
    %cst_20 = arith.constant dense<0.000000e+00> : vector<8xf32>
    %40 = vector.multi_reduction <add>, %39, %cst_20 [1] : vector<8x32xf32> to vector<8xf32>
    %41 = vector.shape_cast %40 : vector<8xf32> to vector<8x1xf32>
    %cst_21 = arith.constant 3.200000e+01 : f32
    %42 = vector.broadcast %cst_21 : f32 to vector<8x1xf32>
    %43 = arith.divf %41, %42 : vector<8x1xf32>
    %44 = vector.broadcast %43 : vector<8x1xf32> to vector<8x32xf32>
    %45 = arith.subf %39, %44 : vector<8x32xf32>
    %46 = arith.mulf %45, %45 : vector<8x32xf32>
    %cst_22 = arith.constant dense<0.000000e+00> : vector<8xf32>
    %47 = vector.multi_reduction <add>, %46, %cst_22 [1] : vector<8x32xf32> to vector<8xf32>
    %48 = vector.shape_cast %47 : vector<8xf32> to vector<8x1xf32>
    %cst_23 = arith.constant 3.200000e+01 : f32
    %49 = vector.broadcast %cst_23 : f32 to vector<8x1xf32>
    %50 = arith.divf %48, %49 : vector<8x1xf32>
    %cst_24 = arith.constant 9.99999974E-6 : f32
    %51 = vector.broadcast %cst_24 : f32 to vector<8x1xf32>
    %52 = arith.addf %50, %51 : vector<8x1xf32>
    %53 = math.rsqrt %52 : vector<8x1xf32>
    %54 = vector.broadcast %53 : vector<8x1xf32> to vector<8x32xf32>
    %55 = arith.mulf %45, %54 : vector<8x32xf32>
    %56 = vector.broadcast %34 : vector<1x32xf32> to vector<8x32xf32>
    %57 = arith.mulf %55, %56 : vector<8x32xf32>
    %58 = vector.broadcast %35 : vector<1x32xf32> to vector<8x32xf32>
    %59 = arith.addf %57, %58 : vector<8x32xf32>
    %cst_25 = arith.constant 0.00999999977 : f32
    %60 = vector.broadcast %cst_25 : f32 to vector<8x32xf32>
    %61 = arith.mulf %60, %59 : vector<8x32xf32>
    %62 = arith.maximumf %59, %61 : vector<8x32xf32>
    %63 = arith.truncf %62 : vector<8x32xf32> to vector<8x32xbf16>
    %c6 = arith.constant 6 : index
    %c0_26 = arith.constant 0 : index
    %64 = vector.load %arg7[%c6, %c0_26] : memref<9x32xf32, #tpu.memory_space<vmem>>, vector<1x32xf32>
    %c7 = arith.constant 7 : index
    %c0_27 = arith.constant 0 : index
    %65 = vector.load %arg7[%c7, %c0_27] : memref<9x32xf32, #tpu.memory_space<vmem>>, vector<1x32xf32>
    %c8 = arith.constant 8 : index
    %c0_28 = arith.constant 0 : index
    %66 = vector.load %arg7[%c8, %c0_28] : memref<9x32xf32, #tpu.memory_space<vmem>>, vector<1x32xf32>
    %c0_29 = arith.constant 0 : index
    %c0_30 = arith.constant 0 : index
    %67 = vector.load %arg5[%c0_29, %c0_30] : memref<32x32xbf16, #tpu.memory_space<vmem>>, vector<32x32xbf16>
    %cst_31 = arith.constant dense<0.000000e+00> : vector<8x32xf32>
    %68 = tpu.matmul %63, %67, %cst_31 {dimension_numbers = #tpu.dot_dimension_numbers<[1], [0], [0], [1], [0, 0, 1, 1], [], []>} : vector<8x32xbf16>, vector<32x32xbf16>, vector<8x32xf32> -> vector<8x32xf32>
    %69 = vector.broadcast %64 : vector<1x32xf32> to vector<8x32xf32>
    %70 = arith.addf %68, %69 : vector<8x32xf32>
    %cst_32 = arith.constant dense<0.000000e+00> : vector<8xf32>
    %71 = vector.multi_reduction <add>, %70, %cst_32 [1] : vector<8x32xf32> to vector<8xf32>
    %72 = vector.shape_cast %71 : vector<8xf32> to vector<8x1xf32>
    %cst_33 = arith.constant 3.200000e+01 : f32
    %73 = vector.broadcast %cst_33 : f32 to vector<8x1xf32>
    %74 = arith.divf %72, %73 : vector<8x1xf32>
    %75 = vector.broadcast %74 : vector<8x1xf32> to vector<8x32xf32>
    %76 = arith.subf %70, %75 : vector<8x32xf32>
    %77 = arith.mulf %76, %76 : vector<8x32xf32>
    %cst_34 = arith.constant dense<0.000000e+00> : vector<8xf32>
    %78 = vector.multi_reduction <add>, %77, %cst_34 [1] : vector<8x32xf32> to vector<8xf32>
    %79 = vector.shape_cast %78 : vector<8xf32> to vector<8x1xf32>
    %cst_35 = arith.constant 3.200000e+01 : f32
    %80 = vector.broadcast %cst_35 : f32 to vector<8x1xf32>
    %81 = arith.divf %79, %80 : vector<8x1xf32>
    %cst_36 = arith.constant 9.99999974E-6 : f32
    %82 = vector.broadcast %cst_36 : f32 to vector<8x1xf32>
    %83 = arith.addf %81, %82 : vector<8x1xf32>
    %84 = math.rsqrt %83 : vector<8x1xf32>
    %85 = vector.broadcast %84 : vector<8x1xf32> to vector<8x32xf32>
    %86 = arith.mulf %76, %85 : vector<8x32xf32>
    %87 = vector.broadcast %65 : vector<1x32xf32> to vector<8x32xf32>
    %88 = arith.mulf %86, %87 : vector<8x32xf32>
    %89 = vector.broadcast %66 : vector<1x32xf32> to vector<8x32xf32>
    %90 = arith.addf %88, %89 : vector<8x32xf32>
    %cst_37 = arith.constant 0.00999999977 : f32
    %91 = vector.broadcast %cst_37 : f32 to vector<8x32xf32>
    %92 = arith.mulf %91, %90 : vector<8x32xf32>
    %93 = arith.maximumf %90, %92 : vector<8x32xf32>
    %94 = arith.truncf %93 : vector<8x32xf32> to vector<8x32xbf16>
    %c0_38 = arith.constant 0 : index
    %c0_39 = arith.constant 0 : index
    %95 = vector.load %arg6[%c0_38, %c0_39] : memref<32x128xbf16, #tpu.memory_space<vmem>>, vector<32x128xbf16>
    %cst_40 = arith.constant dense<0.000000e+00> : vector<8x128xf32>
    %96 = tpu.matmul %94, %95, %cst_40 {dimension_numbers = #tpu.dot_dimension_numbers<[1], [0], [0], [1], [0, 0, 1, 1], [], []>} : vector<8x32xbf16>, vector<32x128xbf16>, vector<8x128xf32> -> vector<8x128xf32>
    %c0_41 = arith.constant 0 : index
    %c0_42 = arith.constant 0 : index
    %97 = vector.load %arg8[%c0_41, %c0_42] : memref<1x128xf32, #tpu.memory_space<vmem>>, vector<1x128xf32>
    %98 = vector.broadcast %97 : vector<1x128xf32> to vector<8x128xf32>
    %99 = arith.addf %96, %98 : vector<8x128xf32>
    %100 = arith.negf %99 : vector<8x128xf32>
    %101 = math.exp %100 : vector<8x128xf32>
    %cst_43 = arith.constant 1.000000e+00 : f32
    %102 = vector.broadcast %cst_43 : f32 to vector<8x128xf32>
    %103 = arith.addf %102, %101 : vector<8x128xf32>
    %104 = arith.divf %102, %103 : vector<8x128xf32>
    %105 = arith.truncf %104 : vector<8x128xf32> to vector<8x128xbf16>
    %c0_44 = arith.constant 0 : index
    %c0_45 = arith.constant 0 : index
    %c0_46 = arith.constant 0 : index
    %106 = vector.load %arg9[%c0_44, %c0_45, %c0_46] : memref<1x8x128xbf16, #tpu.memory_space<vmem>>, vector<1x8x128xbf16>
    %107 = vector.shape_cast %106 : vector<1x8x128xbf16> to vector<8x128xbf16>
    %108 = vector.shape_cast %105 : vector<8x128xbf16> to vector<1x8x128xbf16>
    tpu.vector_store %arg9[%c0_44, %c0_45, %c0_46], %108 {strides = array<i32>} : memref<1x8x128xbf16, #tpu.memory_space<vmem>>, vector<1x8x128xbf16>,
    return
  }
  func.func @transform_0(%arg0: i32, %arg1: i32) -> (i32, i32, i32) {
    %c0_i32 = arith.constant 0 : i32
    %c0_i32_0 = arith.constant 0 : i32
    return %arg0, %arg1, %c0_i32 : i32, i32, i32
  }
  func.func @transform_1(%arg0: i32, %arg1: i32) -> (i32, i32) {
    %c0_i32 = arith.constant 0 : i32
    %c0_i32_0 = arith.constant 0 : i32
    %c0_i32_1 = arith.constant 0 : i32
    return %c0_i32, %c0_i32_0 : i32, i32
  }
  func.func @transform_2(%arg0: i32, %arg1: i32) -> (i32, i32) {
    %c0_i32 = arith.constant 0 : i32
    %c0_i32_0 = arith.constant 0 : i32
    %c0_i32_1 = arith.constant 0 : i32
    return %c0_i32, %c0_i32_0 : i32, i32
  }
  func.func @transform_3(%arg0: i32, %arg1: i32) -> (i32, i32) {
    %c0_i32 = arith.constant 0 : i32
    %c0_i32_0 = arith.constant 0 : i32
    %c0_i32_1 = arith.constant 0 : i32
    return %c0_i32, %c0_i32_0 : i32, i32
  }
  func.func @transform_4(%arg0: i32, %arg1: i32) -> (i32, i32) {
    %c0_i32 = arith.constant 0 : i32
    %c0_i32_0 = arith.constant 0 : i32
    %c0_i32_1 = arith.constant 0 : i32
    return %c0_i32, %c0_i32_0 : i32, i32
  }
  func.func @transform_5(%arg0: i32, %arg1: i32) -> (i32, i32) {
    %c0_i32 = arith.constant 0 : i32
    %c0_i32_0 = arith.constant 0 : i32
    %c0_i32_1 = arith.constant 0 : i32
    return %c0_i32, %c0_i32_0 : i32, i32
  }
  func.func @transform_6(%arg0: i32, %arg1: i32) -> (i32, i32) {
    %c0_i32 = arith.constant 0 : i32
    %c0_i32_0 = arith.constant 0 : i32
    %c0_i32_1 = arith.constant 0 : i32
    return %c0_i32, %c0_i32_0 : i32, i32
  }
  func.func @transform_7(%arg0: i32, %arg1: i32) -> (i32, i32, i32) {
    %c0_i32 = arith.constant 0 : i32
    %c0_i32_0 = arith.constant 0 : i32
    return %arg0, %arg1, %c0_i32 : i32, i32, i32
  }
}

</mosaic_0001>

<llo_original>
// kernel: mel_mlp_estimator.2
$region0: #{mel_mlp_estimator.2}
  #allocation0 [shape = 'u32[]', space=smem, size = 0x4, offset = 0x4, fixed_abs, tag = 'smem constant byte address 0x4 - core index']
  #allocation1 [shape = 'u32[72,128]{1,0:T(1,128)}', space=vmem, size = 0x9000, scoped, tag = 'internal scratch']
  %s0 = inlined_call_operand.vmem [shape: f32[2,19,32], index: 0, kind: input, shape index: {}]
  %s1 = inlined_call_operand.hbm [shape: bf16[128,256], index: 1, kind: input, shape index: {}]
  %s2 = inlined_call_operand.hbm [shape: f32[128,128], index: 2, kind: input, shape index: {}]
  %s3 = inlined_call_operand.vmem [shape: bf16[2,16,128], index: 3, kind: output, shape index: {0}]
  %s4 = inlined_call_operand.vmem [shape: f32[2,16,128], index: 4, kind: output, shape index: {1}]
  %s5 = inlined_call_operand.vmem [shape: f32[2,16,128], index: 5, kind: output, shape index: {2}]
  %6 = xla_tuple %s3, %s4, %s5
  %s7 = sld [smem:[#allocation0]]
  $region69: #{mel_mlp_estimator.2} parent=0
    _
  %s9 = ssub.s32 1, %s7
  %s10 = scalar_select 0, %s9, %s7
  $region1: #{mel_mlp_estimator.2} parent=0
    #allocation2 [shape = 'u8[65536]{0}', space=vmem, size = 0x10000, scoped, tag = 'input window, operand 1, single buffered']
    #allocation3 [shape = 's32[2]{0}', space=sflag, size = 0x8, scoped, tag = 'scoped memory for mel_mlp_estimator.2']
    #allocation4 [shape = 'u8[65536]{0}', space=vmem, size = 0x10000, scoped, tag = 'input window, operand 2, single buffered']
    #allocation5 [shape = 's32[1]{0}', space=sflag, size = 0x4, scoped, tag = 'scoped memory for mel_mlp_estimator.2']
    %11 = vsyncpa [#allocation3], 0
    %12 = vsyncpa [#allocation5], 0
    loop: start=0, step=1, limit=6
    $region2: #{mel_mlp_estimator.2} parent=1 // loop_pre_header
      _
    $region3: #{mel_mlp_estimator.2} parent=1 // loop_header
      %s14 = sphi 0, %s18
      %p15 = scmp.ge.s32.totalorder %s14, 6
      %s21 = sphi 0, %s33
      %s22 = sphi 0, %s29
      %s23 = sphi 0, %s21
      %s24 = sphi 0, %s22
      %s25 = sphi 0, %s23
      %s26 = sphi 0, %s24
      %s36 = sphi 0, %s38
      %s39 = sphi 0, %s36
      %s40 = sphi 0, %s39
      %s56 = sphi 0, %s40
      %s60 = sphi 0, %s60
      %s62 = sphi 0, %s60
      %s63 = sphi 0, %s62
      %s77 = sphi 0, %s63
      %s81 = sphi 0, %s81
      %s83 = sphi 0, %s81
      %s84 = sphi 0, %s83
      %s98 = sphi 0, %s84
      %s106 = sphi 0, %s108
      %s109 = sphi 0, %s106
      %s110 = sphi 0, %s109
      %s126 = sphi 0, %s110
      %s134 = sphi 0, %s136
      %s137 = sphi 0, %s134
      %s138 = sphi 0, %s137
      %s154 = sphi 0, %s138
      %s162 = sphi 0, %s164
      %s165 = sphi 0, %s162
      %s166 = sphi 0, %s165
      %s182 = sphi 0, %s166
    $region4: #{mel_mlp_estimator.2} parent=1 // loop_header_branch
      %17 = sbr.rel (%p15) target = $region8
    $region5: #{mel_mlp_estimator.2} parent=1 // loop_body
      %s19 = ssub.s32 %s14, 1
      %s20 = ssub.s32 %s14, 2
      %s27 = sadd.s32 1, %s22
      %p28 = scmp.ge.s32.totalorder %s27, 2
      %s29 = scalar_select %p28, 0, %s27
      %s30 = sadd.s32 1, %s21
      %s31 = scalar_select %p28, %s30, %s21
      %p32 = scmp.ge.s32.totalorder %s31, 2
      %s33 = scalar_select %p32, 0, %s31
      %s34 = ssub.s32 %s21, %s33
      %p35 = scmp.eq.s32.totalorder %s34, 0
      %s37 = sadd.s32 %s36, 1
      %s38 = scalar_select %p35, %s36, %s37
      %p41 = pneg %p35
      %p42 = scmp.eq.s32.totalorder %s14, 3
      %p43 = por %p41, %p42
      %p44 = scmp.ne.s32.totalorder %s36, %s39
      %p45 = scmp.eq.s32.totalorder %s14, 0
      %p46 = por %p44, %p45
      %p47 = scmp.ne.s32.totalorder %s36, %s39
      %p48 = scmp.eq.s32.totalorder %s19, 3
      %p49 = por %p47, %p48
      %p50 = scmp.ne.s32.totalorder %s39, %s40
      %p51 = scmp.eq.s32.totalorder %s19, 0
      %p52 = por %p50, %p51
      %p53 = scmp.ne.s32.totalorder %s39, %s40
      %p54 = scmp.eq.s32.totalorder %s20, 3
      %p55 = por %p53, %p54
      %p57 = scmp.ne.s32.totalorder %s40, %s56
      %p58 = scmp.eq.s32.totalorder %s20, 0
      %p59 = por %p57, %p58
      %s61 = sadd.s32 %s60, 1
      %p64 = scmp.eq.s32.totalorder %s14, 3
      %p65 = scmp.ne.s32.totalorder %s60, %s62
      %p66 = scmp.eq.s32.totalorder %s14, 0
      %p67 = por %p65, %p66
      %p68 = scmp.ne.s32.totalorder %s60, %s62
      %p69 = scmp.eq.s32.totalorder %s19, 3
      %p70 = por %p68, %p69
      %p71 = scmp.ne.s32.totalorder %s62, %s63
      %p72 = scmp.eq.s32.totalorder %s19, 0
      %p73 = por %p71, %p72
      %p74 = scmp.ne.s32.totalorder %s62, %s63
      %p75 = scmp.eq.s32.totalorder %s20, 3
      %p76 = por %p74, %p75
      %p78 = scmp.ne.s32.totalorder %s63, %s77
      %p79 = scmp.eq.s32.totalorder %s20, 0
      %p80 = por %p78, %p79
      %s82 = sadd.s32 %s81, 1
      %p85 = scmp.eq.s32.totalorder %s14, 3
      %p86 = scmp.ne.s32.totalorder %s81, %s83
      %p87 = scmp.eq.s32.totalorder %s14, 0
      %p88 = por %p86, %p87
      %p89 = scmp.ne.s32.totalorder %s81, %s83
      %p90 = scmp.eq.s32.totalorder %s19, 3
      %p91 = por %p89, %p90
      %p92 = scmp.ne.s32.totalorder %s83, %s84
      %p93 = scmp.eq.s32.totalorder %s19, 0
      %p94 = por %p92, %p93
      %p95 = scmp.ne.s32.totalorder %s83, %s84
      %p96 = scmp.eq.s32.totalorder %s20, 3
      %p97 = por %p95, %p96
      %p99 = scmp.ne.s32.totalorder %s84, %s98
      %p100 = scmp.eq.s32.totalorder %s20, 0
      %p101 = por %p99, %p100
      %s102 = ssub.s32 %s21, %s33
      %s103 = ssub.s32 %s22, %s29
      %s104 = sor.u32 %s102, %s103
      %p105 = scmp.eq.s32.totalorder %s104, 0
      %s107 = sadd.s32 %s106, 1
      %s108 = scalar_select %p105, %s106, %s107
      %p111 = pneg %p105
      %p112 = scmp.eq.s32.totalorder %s14, 3
      %p113 = por %p111, %p112
      %p114 = scmp.ne.s32.totalorder %s106, %s109
      %p115 = scmp.eq.s32.totalorder %s14, 0
      %p116 = por %p114, %p115
      %p117 = scmp.ne.s32.totalorder %s106, %s109
      %p118 = scmp.eq.s32.totalorder %s19, 3
      %p119 = por %p117, %p118
      %p120 = scmp.ne.s32.totalorder %s109, %s110
      %p121 = scmp.eq.s32.totalorder %s19, 0
      %p122 = por %p120, %p121
      %p123 = scmp.ne.s32.totalorder %s109, %s110
      %p124 = scmp.eq.s32.totalorder %s20, 3
      %p125 = por %p123, %p124
      %p127 = scmp.ne.s32.totalorder %s110, %s126
      %p128 = scmp.eq.s32.totalorder %s20, 0
      %p129 = por %p127, %p128
      %s130 = ssub.s32 %s21, %s33
      %s131 = ssub.s32 %s22, %s29
      %s132 = sor.u32 %s130, %s131
      %p133 = scmp.eq.s32.totalorder %s132, 0
      %s135 = sadd.s32 %s134, 1
      %s136 = scalar_select %p133, %s134, %s135
      %p139 = pneg %p133
      %p140 = scmp.eq.s32.totalorder %s14, 3
      %p141 = por %p139, %p140
      %p142 = scmp.ne.s32.totalorder %s134, %s137
      %p143 = scmp.eq.s32.totalorder %s14, 0
      %p144 = por %p142, %p143
      %p145 = scmp.ne.s32.totalorder %s134, %s137
      %p146 = scmp.eq.s32.totalorder %s19, 3
      %p147 = por %p145, %p146
      %p148 = scmp.ne.s32.totalorder %s137, %s138
      %p149 = scmp.eq.s32.totalorder %s19, 0
      %p150 = por %p148, %p149
      %p151 = scmp.ne.s32.totalorder %s137, %s138
      %p152 = scmp.eq.s32.totalorder %s20, 3
      %p153 = por %p151, %p152
      %p155 = scmp.ne.s32.totalorder %s138, %s154
      %p156 = scmp.eq.s32.totalorder %s20, 0
      %p157 = por %p155, %p156
      %s158 = ssub.s32 %s21, %s33
      %s159 = ssub.s32 %s22, %s29
      %s160 = sor.u32 %s158, %s159
      %p161 = scmp.eq.s32.totalorder %s160, 0
      %s163 = sadd.s32 %s162, 1
      %s164 = scalar_select %p161, %s162, %s163
      %p167 = pneg %p161
      %p168 = scmp.eq.s32.totalorder %s14, 3
      %p169 = por %p167, %p168
      %p170 = scmp.ne.s32.totalorder %s162, %s165
      %p171 = scmp.eq.s32.totalorder %s14, 0
      %p172 = por %p170, %p171
      %p173 = scmp.ne.s32.totalorder %s162, %s165
      %p174 = scmp.eq.s32.totalorder %s19, 3
      %p175 = por %p173, %p174
      %p176 = scmp.ne.s32.totalorder %s165, %s166
      %p177 = scmp.eq.s32.totalorder %s19, 0
      %p178 = por %p176, %p177
      %p179 = scmp.ne.s32.totalorder %s165, %s166
      %p180 = scmp.eq.s32.totalorder %s20, 3
      %p181 = por %p179, %p180
      %p183 = scmp.ne.s32.totalorder %s166, %s182
      %p184 = scmp.eq.s32.totalorder %s20, 0
      %p185 = por %p183, %p184
      %p186 = scmp.le.s32.totalorder 1, %s14
      %p187 = scmp.lt.s32.totalorder %s14, 5
      %p188 = pnand %p186, %p187
      %p189 = pneg %p188
      // Predicated region
      $region9: #{mel_mlp_estimator.2} parent=5 // pred_check
        _
      $region10: #{mel_mlp_estimator.2} parent=5 // pred_check_branch
        %191 = sbr.rel (%p188) target = $region12
      $region11: #{mel_mlp_estimator.2} parent=5 // pred_region
        %s192 = ssub.s32 %s14, 1
        // Predicated region
        $region13: #{mel_mlp_estimator.2} parent=11 // pred_check
          %p193 = pneg %p73
        $region14: #{mel_mlp_estimator.2} parent=11 // pred_check_branch
          %195 = sbr.rel (%p193) target = $region16
        $region15: #{mel_mlp_estimator.2} parent=11 // pred_region
          %197 = vsyncadd [#allocation3], 0
          %s198 = sshll.u32 %s1, 4
          %s199 = int_to_ptr.hbm [resolvable:$true] %s198
          %s200 = sshll.u32 [#allocation2], 4
          %s201 = int_to_ptr.vmem [resolvable:$true] %s200
          %206 = dma.hbm_to_vmem [thread:$0]  %s199, 2048, %s201, [#allocation3], 128, 128, 8
        $region16: #{mel_mlp_estimator.2} parent=11 // pred_fallthru
          _
        // Predicated region
        $region17: #{mel_mlp_estimator.2} parent=11 // pred_check
          %p207 = pneg %p94
        $region18: #{mel_mlp_estimator.2} parent=11 // pred_check_branch
          %209 = sbr.rel (%p207) target = $region20
        $region19: #{mel_mlp_estimator.2} parent=11 // pred_region
          %211 = vsyncadd [#allocation5], 0
          %s212 = sshll.u32 %s2, 4
          %s213 = int_to_ptr.hbm [resolvable:$true] %s212
          %s214 = sshll.u32 [#allocation4], 4
          %s215 = int_to_ptr.vmem [resolvable:$true] %s214
          %220 = dma.hbm_to_vmem [thread:$0]  %s213, 2048, %s215, [#allocation5], 128, 128, 8
        $region20: #{mel_mlp_estimator.2} parent=11 // pred_fallthru
          _
      $region12: #{mel_mlp_estimator.2} parent=5 // pred_fallthru
        _
      %p221 = scmp.lt.s32.totalorder %s14, 4
      // Predicated region
      $region21: #{mel_mlp_estimator.2} parent=5 // pred_check
        %p222 = pneg %p221
      $region22: #{mel_mlp_estimator.2} parent=5 // pred_check_branch
        %224 = sbr.rel (%p222) target = $region24
      $region23: #{mel_mlp_estimator.2} parent=5 // pred_region
        // Predicated region
        $region25: #{mel_mlp_estimator.2} parent=23 // pred_check
          %p225 = pneg %p46
        $region26: #{mel_mlp_estimator.2} parent=23 // pred_check_branch
          %227 = sbr.rel (%p225) target = $region28
        $region27: #{mel_mlp_estimator.2} parent=23 // pred_region
          %p228 = scmp.lt.s32.totalorder %s21, 1
          %s229 = scalar_select %p228, %s21, 1
          %s230 = smul.addr %s229, 3
          %s231 = smul.addr %s230, 8
          %s232 = scalar_lea.vmem %s0, %s231
        $region28: #{mel_mlp_estimator.2} parent=23 // pred_fallthru
          _
      $region24: #{mel_mlp_estimator.2} parent=5 // pred_fallthru
        _
      %p233 = scmp.le.s32.totalorder 1, %s14
      %p234 = scmp.lt.s32.totalorder %s14, 5
      %p235 = pnand %p233, %p234
      %p236 = pneg %p235
      // Predicated region
      $region29: #{mel_mlp_estimator.2} parent=5 // pred_check
        _
      $region30: #{mel_mlp_estimator.2} parent=5 // pred_check_branch
        %238 = sbr.rel (%p235) target = $region32
      $region31: #{mel_mlp_estimator.2} parent=5 // pred_region
        %s239 = ssub.s32 %s14, 1
        // Predicated region
        $region33: #{mel_mlp_estimator.2} parent=31 // pred_check
          %p240 = pneg %p73
        $region34: #{mel_mlp_estimator.2} parent=31 // pred_check_branch
          %242 = sbr.rel (%p240) target = $region36
        $region35: #{mel_mlp_estimator.2} parent=31 // pred_region
          %244 = dma.done [#allocation3], 2048
        $region36: #{mel_mlp_estimator.2} parent=31 // pred_fallthru
          _
        // Predicated region
        $region37: #{mel_mlp_estimator.2} parent=31 // pred_check
          %p245 = pneg %p94
        $region38: #{mel_mlp_estimator.2} parent=31 // pred_check_branch
          %247 = sbr.rel (%p245) target = $region40
        $region39: #{mel_mlp_estimator.2} parent=31 // pred_region
          %249 = dma.done [#allocation5], 2048
        $region40: #{mel_mlp_estimator.2} parent=31 // pred_fallthru
          _
        %p250 = scmp.lt.s32.totalorder %s23, 1
        %s251 = scalar_select %p250, %s23, 1
        %s252 = smul.addr %s251, 3
        %s253 = smul.addr %s252, 8
        %s254 = scalar_lea.vmem %s0, %s253
        %p255 = pneg %p52
        %p256 = pneg %p49
        %p257 = pneg %p73
        %p258 = pneg %p70
        %p259 = pneg %p94
        %p260 = pneg %p91
        %p261 = pneg %p122
        %p262 = pneg %p119
        %p263 = scmp.lt.s32.totalorder %s23, 1
        %s264 = scalar_select %p263, %s23, 1
        %p265 = scmp.lt.s32.totalorder %s24, 1
        %s266 = scalar_select %p265, %s24, 1
        %s267 = smul.addr %s264, 2
        %s268 = sadd.s32 %s266, %s267
        %s269 = smul.addr %s268, 4
        %s270 = scalar_lea.vmem %s3, %s269
        %p271 = pneg %p150
        %p272 = pneg %p147
        %p273 = scmp.lt.s32.totalorder %s23, 1
        %s274 = scalar_select %p273, %s23, 1
        %p275 = scmp.lt.s32.totalorder %s24, 1
        %s276 = scalar_select %p275, %s24, 1
        %s277 = smul.addr %s274, 2
        %s278 = sadd.s32 %s276, %s277
        %s279 = smul.addr %s278, 8
        %s280 = scalar_lea.vmem %s4, %s279
        %p281 = pneg %p178
        %p282 = pneg %p175
        %p283 = scmp.lt.s32.totalorder %s23, 1
        %s284 = scalar_select %p283, %s23, 1
        %p285 = scmp.lt.s32.totalorder %s24, 1
        %s286 = scalar_select %p285, %s24, 1
        %s287 = smul.addr %s284, 2
        %s288 = sadd.s32 %s286, %s287
        %s289 = smul.addr %s288, 8
        %s290 = scalar_lea.vmem %s5, %s289
        %p291 = scmp.lt.s32.totalorder %s23, 1
        %s292 = scalar_select %p291, %s23, 1
        %s293 = smul.addr %s292, 3
        %s294 = smul.addr %s293, 8
        %s295 = scalar_lea.vmem %s0, %s294
        %p296 = scmp.lt.s32.totalorder %s23, 1
        %s297 = scalar_select %p296, %s23, 1
        %p298 = scmp.lt.s32.totalorder %s24, 1
        %s299 = scalar_select %p298, %s24, 1
        %s300 = smul.addr %s297, 2
        %s301 = sadd.s32 %s299, %s300
        %s302 = smul.addr %s301, 4
        %s303 = scalar_lea.vmem %s3, %s302
        %p304 = scmp.lt.s32.totalorder %s23, 1
        %s305 = scalar_select %p304, %s23, 1
        %p306 = scmp.lt.s32.totalorder %s24, 1
        %s307 = scalar_select %p306, %s24, 1
        %s308 = smul.addr %s305, 2
        %s309 = sadd.s32 %s307, %s308
        %s310 = smul.addr %s309, 8
        %s311 = scalar_lea.vmem %s4, %s310
        %p312 = scmp.lt.s32.totalorder %s23, 1
        %s313 = scalar_select %p312, %s23, 1
        %p314 = scmp.lt.s32.totalorder %s24, 1
        %s315 = scalar_select %p314, %s24, 1
        %s316 = smul.addr %s313, 2
        %s317 = sadd.s32 %s315, %s316
        %s318 = smul.addr %s317, 8
        %s319 = scalar_lea.vmem %s5, %s318
        %s321 = smul.u32 %s24, 8
        %s322 = scalar_lea.vmem %s295, %s321
        %v323 = vld [vmem:[%s322] sm:$0xff]
        %v324 = vpack.c.bf16 %v323, %v323
        %v325 = vld [vmem:[#allocation2] sm:$0xff]
        %v326 = vld [vmem:[#allocation2 + $0x8] sm:$0xff]
        %v327 = vld [vmem:[#allocation2 + $0x10] sm:$0xff]
        %v328 = vld [vmem:[#allocation2 + $0x18] sm:$0xff]
        %s329 = sadd.s32 %s321, 1
        %s330 = scalar_lea.vmem %s295, %s329
        %v331 = vld [vmem:[%s330] sm:$0xff]
        %v332 = vpack.c.bf16 %v331, %v331
        %v333 = vld [vmem:[#allocation2 + $0x20] sm:$0xff]
        %v334 = vld [vmem:[#allocation2 + $0x28] sm:$0xff]
        %v335 = vld [vmem:[#allocation2 + $0x30] sm:$0xff]
        %v336 = vld [vmem:[#allocation2 + $0x38] sm:$0xff]
        %v341 = vunpack.c.l.b16 %v333
        %v342 = vunpack.c.h.b16 %v333
        %v343 = vunpack.c.l.b16 %v334
        %v344 = vunpack.c.h.b16 %v334
        %v345 = vunpack.c.l.b16 %v335
        %v346 = vunpack.c.h.b16 %v335
        %v347 = vunpack.c.l.b16 %v336
        %v348 = vunpack.c.h.b16 %v336
        %v349 = vpack.c.b16 %v343, %v341
        %v350 = vpack.c.b16 %v344, %v342
        %v351 = vpack.c.b16 %v347, %v345
        %v352 = vpack.c.b16 %v348, %v346
        %vm357 = vcmask 261120
        %v359 = vsel %vm357, %v332, 0
        %361 = vmatpush.bf16.msra.mxu0 0
        %362 = vmatpush.bf16.msra.mxu0 0
        %363 = vmatpush.bf16.msra.mxu0 0
        %364 = vmatpush.bf16.msra.mxu0 0
        %365 = vmatpush.bf16.msra.mxu0 0
        %366 = vmatpush.bf16.msra.mxu0 0
        %367 = vmatpush.bf16.msra.mxu0 %v351
        %368 = vmatpush.bf16.msra.mxu0 %v349
        %369 = vmatmul.bf16.gmra.mxu0 %v359
        %v370 = vpop.f32.mrf.mxu0
        %v371 = vadd.f32 0.0, %v370
        %v372 = vpop.f32.mrf.mxu0
        %373 = vdwg.mxu0
        %374 = vmatpush.bf16.msra.mxu0 0
        %375 = vmatpush.bf16.msra.mxu0 0
        %376 = vmatpush.bf16.msra.mxu0 0
        %377 = vmatpush.bf16.msra.mxu0 0
        %378 = vmatpush.bf16.msra.mxu0 0
        %379 = vmatpush.bf16.msra.mxu0 0
        %380 = vmatpush.bf16.msra.mxu0 %v352
        %381 = vmatpush.bf16.msra.mxu0 %v350
        %382 = vmatmul.bf16.gmra.mxu0 %v359
        %v383 = vpop.f32.mrf.mxu0
        %v384 = vadd.f32 0.0, %v383
        %v385 = vpop.f32.mrf.mxu0
        %386 = vdwg.mxu0
        %v391 = vunpack.c.l.b16 %v325
        %v392 = vunpack.c.h.b16 %v325
        %v393 = vunpack.c.l.b16 %v326
        %v394 = vunpack.c.h.b16 %v326
        %v395 = vunpack.c.l.b16 %v327
        %v396 = vunpack.c.h.b16 %v327
        %v397 = vunpack.c.l.b16 %v328
        %v398 = vunpack.c.h.b16 %v328
        %v399 = vpack.c.b16 %v393, %v391
        %v400 = vpack.c.b16 %v394, %v392
        %v401 = vpack.c.b16 %v397, %v395
        %v402 = vpack.c.b16 %v398, %v396
        %v408 = vsel %vm357, %v324, 0
        %410 = vmatpush.bf16.msra.mxu0 0
        %411 = vmatpush.bf16.msra.mxu0 0
        %412 = vmatpush.bf16.msra.mxu0 0
        %413 = vmatpush.bf16.msra.mxu0 0
        %414 = vmatpush.bf16.msra.mxu0 0
        %415 = vmatpush.bf16.msra.mxu0 0
        %416 = vmatpush.bf16.msra.mxu0 %v401
        %417 = vmatpush.bf16.msra.mxu0 %v399
        %418 = vmatmul.bf16.gmra.mxu0 %v408
        %v419 = vpop.f32.mrf.mxu0
        %v420 = vadd.f32 %v371, %v419
        %v421 = vpop.f32.mrf.mxu0
        %422 = vdwg.mxu0
        %423 = vmatpush.bf16.msra.mxu0 0
        %424 = vmatpush.bf16.msra.mxu0 0
        %425 = vmatpush.bf16.msra.mxu0 0
        %426 = vmatpush.bf16.msra.mxu0 0
        %427 = vmatpush.bf16.msra.mxu0 0
        %428 = vmatpush.bf16.msra.mxu0 0
        %429 = vmatpush.bf16.msra.mxu0 %v402
        %430 = vmatpush.bf16.msra.mxu0 %v400
        %431 = vmatmul.bf16.gmra.mxu0 %v408
        %v432 = vpop.f32.mrf.mxu0
        %v433 = vadd.f32 %v384, %v432
        %v434 = vpop.f32.mrf.mxu0
        %435 = vdwg.mxu0
        %s436 = sadd.s32 %s321, 2
        %s437 = scalar_lea.vmem %s295, %s436
        %v438 = vld [vmem:[%s437] sm:$0xff]
        %v439 = vpack.c.bf16 %v438, %v438
        %v440 = vld [vmem:[#allocation2 + $0x40] sm:$0xff]
        %v441 = vld [vmem:[#allocation2 + $0x48] sm:$0xff]
        %v442 = vld [vmem:[#allocation2 + $0x50] sm:$0xff]
        %v443 = vld [vmem:[#allocation2 + $0x58] sm:$0xff]
        %v448 = vunpack.c.l.b16 %v440
        %v449 = vunpack.c.h.b16 %v440
        %v450 = vunpack.c.l.b16 %v441
        %v451 = vunpack.c.h.b16 %v441
        %v452 = vunpack.c.l.b16 %v442
        %v453 = vunpack.c.h.b16 %v442
        %v454 = vunpack.c.l.b16 %v443
        %v455 = vunpack.c.h.b16 %v443
        %v456 = vpack.c.b16 %v450, %v448
        %v457 = vpack.c.b16 %v451, %v449
        %v458 = vpack.c.b16 %v454, %v452
        %v459 = vpack.c.b16 %v455, %v453
        %v465 = vsel %vm357, %v439, 0
        %467 = vmatpush.bf16.msra.mxu0 0
        %468 = vmatpush.bf16.msra.mxu0 0
        %469 = vmatpush.bf16.msra.mxu0 0
        %470 = vmatpush.bf16.msra.mxu0 0
        %471 = vmatpush.bf16.msra.mxu0 0
        %472 = vmatpush.bf16.msra.mxu0 0
        %473 = vmatpush.bf16.msra.mxu0 %v458
        %474 = vmatpush.bf16.msra.mxu0 %v456
        %475 = vmatmul.bf16.gmra.mxu0 %v465
        %v476 = vpop.f32.mrf.mxu0
        %v477 = vadd.f32 0.0, %v476
        %v478 = vpop.f32.mrf.mxu0
        %479 = vdwg.mxu0
        %480 = vmatpush.bf16.msra.mxu0 0
        %481 = vmatpush.bf16.msra.mxu0 0
        %482 = vmatpush.bf16.msra.mxu0 0
        %483 = vmatpush.bf16.msra.mxu0 0
        %484 = vmatpush.bf16.msra.mxu0 0
        %485 = vmatpush.bf16.msra.mxu0 0
        %486 = vmatpush.bf16.msra.mxu0 %v459
        %487 = vmatpush.bf16.msra.mxu0 %v457
        %488 = vmatmul.bf16.gmra.mxu0 %v465
        %v489 = vpop.f32.mrf.mxu0
        %v490 = vadd.f32 0.0, %v489
        %v491 = vpop.f32.mrf.mxu0
        %492 = vdwg.mxu0
        %v493 = vadd.f32 %v420, %v477
        %v494 = vadd.f32 %v433, %v490
        %s495 = sadd.s32 %s321, 3
        %s496 = scalar_lea.vmem %s295, %s495
        %v497 = vld [vmem:[%s496] sm:$0xff]
        %v498 = vpack.c.bf16 %v497, %v497
        %v499 = vld [vmem:[#allocation2 + $0x60] sm:$0xff]
        %v500 = vld [vmem:[#allocation2 + $0x68] sm:$0xff]
        %v501 = vld [vmem:[#allocation2 + $0x70] sm:$0xff]
        %v502 = vld [vmem:[#allocation2 + $0x78] sm:$0xff]
        %v507 = vunpack.c.l.b16 %v499
        %v508 = vunpack.c.h.b16 %v499
        %v509 = vunpack.c.l.b16 %v500
        %v510 = vunpack.c.h.b16 %v500
        %v511 = vunpack.c.l.b16 %v501
        %v512 = vunpack.c.h.b16 %v501
        %v513 = vunpack.c.l.b16 %v502
        %v514 = vunpack.c.h.b16 %v502
        %v515 = vpack.c.b16 %v509, %v507
        %v516 = vpack.c.b16 %v510, %v508
        %v517 = vpack.c.b16 %v513, %v511
        %v518 = vpack.c.b16 %v514, %v512
        %v524 = vsel %vm357, %v498, 0
        %526 = vmatpush.bf16.msra.mxu0 0
        %527 = vmatpush.bf16.msra.mxu0 0
        %528 = vmatpush.bf16.msra.mxu0 0
        %529 = vmatpush.bf16.msra.mxu0 0
        %530 = vmatpush.bf16.msra.mxu0 0
        %531 = vmatpush.bf16.msra.mxu0 0
        %532 = vmatpush.bf16.msra.mxu0 %v517
        %533 = vmatpush.bf16.msra.mxu0 %v515
        %534 = vmatmul.bf16.gmra.mxu0 %v524
        %v535 = vpop.f32.mrf.mxu0
        %v536 = vadd.f32 0.0, %v535
        %v537 = vpop.f32.mrf.mxu0
        %538 = vdwg.mxu0
        %539 = vmatpush.bf16.msra.mxu0 0
        %540 = vmatpush.bf16.msra.mxu0 0
        %541 = vmatpush.bf16.msra.mxu0 0
        %542 = vmatpush.bf16.msra.mxu0 0
        %543 = vmatpush.bf16.msra.mxu0 0
        %544 = vmatpush.bf16.msra.mxu0 0
        %545 = vmatpush.bf16.msra.mxu0 %v518
        %546 = vmatpush.bf16.msra.mxu0 %v516
        %547 = vmatmul.bf16.gmra.mxu0 %v524
        %v548 = vpop.f32.mrf.mxu0
        %v549 = vadd.f32 0.0, %v548
        %v550 = vpop.f32.mrf.mxu0
        %551 = vdwg.mxu0
        %v552 = vadd.f32 %v493, %v536
        %v553 = vadd.f32 %v494, %v549
        %v554 = vmul.f32 %v552, %v552
        %v555 = vmul.f32 %v553, %v553
        %v556 = vadd.f32 %v554, %v555
        %v557 = vrsqrt.pop %v556
        %v558 = vmul.f32 %v557, %v556
        %v559 = vmul.f32 %v558, %v557
        %v560 = vmul.f32 0.5, %v559
        %v561 = vsub.f32 1.5, %v560
        %v562 = vmul.f32 %v557, %v561
        %v563 = vmul.f32 %v556, %v562
        %vm564 = vcmp.eq.f32.partialorder %v556, inf
        %v565 = vsel %vm564, %v556, %v563
        %vm566 = vcmp.eq.f32.partialorder %v556, 0.0
        %v567 = vand.u32 %v556, 2147483648
        %v568 = vsel %vm566, %v567, %v565
        %v569 = vld [vmem:[#allocation4] sm:$0xff]
        %v570 = vld [vmem:[#allocation4 + $0x8] sm:$0xff]
        %v571 = vld [vmem:[#allocation4 + $0x10] sm:$0xff]
        %v572 = vld [vmem:[#allocation4 + $0x18] sm:$0xff]
        %v573 = vld [vmem:[#allocation4 + $0x20] sm:$0xff]
        %v574 = vld [vmem:[#allocation4 + $0x28] sm:$0xff]
        %v575 = vld [vmem:[#allocation4 + $0x30] sm:$0xff]
        %v576 = vld [vmem:[#allocation4 + $0x38] sm:$0xff]
        %v577 = vld [vmem:[#allocation4 + $0x40] sm:$0xff]
        %v578 = vld [vmem:[#allocation4 + $0x48] sm:$0xff]
        %v579 = vld [vmem:[#allocation4 + $0x50] sm:$0xff]
        %v580 = vld [vmem:[#allocation4 + $0x58] sm:$0xff]
        %v581 = vld [vmem:[#allocation4 + $0x60] sm:$0xff]
        %v582 = vld [vmem:[#allocation4 + $0x68] sm:$0xff]
        %v583 = vld [vmem:[#allocation4 + $0x70] sm:$0xff]
        %v584 = vld [vmem:[#allocation4 + $0x78] sm:$0xff]
        %585 = vmatpush.msra.mxu0 %v584
        %586 = vmatpush.msra.mxu0 %v583
        %587 = vmatpush.msra.mxu0 %v582
        %588 = vmatpush.msra.mxu0 %v581
        %589 = vmatpush.msra.mxu0 %v580
        %590 = vmatpush.msra.mxu0 %v579
        %591 = vmatpush.msra.mxu0 %v578
        %592 = vmatpush.msra.mxu0 %v577
        %593 = vmatpush.msra.mxu0 %v576
        %594 = vmatpush.msra.mxu0 %v575
        %595 = vmatpush.msra.mxu0 %v574
        %596 = vmatpush.msra.mxu0 %v573
        %597 = vmatpush.msra.mxu0 %v572
        %598 = vmatpush.msra.mxu0 %v571
        %599 = vmatpush.msra.mxu0 %v570
        %600 = vmatpush.msra.mxu0 %v569
        %601 = vmatmul.f32.gmra.mxu0 %v568
        %v602 = vpop.f32.mrf.mxu0
        %v603 = vadd.f32 0.001, %v602
        %604 = vdwg.mxu0
        %v605 = vlog2.pop %v603
        %v606 = vmul.f32 %v605, 0.6931472
        %v607 = vpack.c.bf16 %v606, %v606
        %608 = vst [vmem:[%s303] sm:$0xf] %v607
        %v609 = vlaneseq
        %v610 = vshrl.u32 %v609, 7
        %v611 = vstv %s321
        %v612 = vadd.s32 %v611, %v610
        %vm613 = vcmp.lt.s32.totalorder %v612, 9
        %v614 = vsel %vm613, 1, 0
        %vm615 = vcmp.eq.s32.totalorder %v614, 1
        %v616 = vsel %vm615, %v606, 0.0
        %v617 = vrot.slane %v616, 4
        %v618 = vadd.f32 %v616, %v617
        %v619 = vrot.slane %v618, 2
        %v620 = vadd.f32 %v618, %v619
        %v621 = vrot.slane %v620, 1
        %v622 = vadd.f32 %v620, %v621
        %v623 = vmul.f32 %v616, %v616
        %v624 = vrot.slane %v623, 4
        %v625 = vadd.f32 %v623, %v624
        %v626 = vrot.slane %v625, 2
        %v627 = vadd.f32 %v625, %v626
        %v628 = vrot.slane %v627, 1
        %v629 = vadd.f32 %v627, %v628
        %630 = vst [vmem:[%s311] sm:$0xff] %v622
        %631 = vst [vmem:[%s319] sm:$0xff] %v629
        %p632 = scmp.lt.s32.totalorder %s23, 1
        %s633 = scalar_select %p632, %s23, 1
        %p634 = scmp.lt.s32.totalorder %s24, 1
        %s635 = scalar_select %p634, %s24, 1
        %s636 = smul.addr %s633, 2
        %s637 = sadd.s32 %s635, %s636
        %s638 = smul.addr %s637, 4
        %s639 = scalar_lea.vmem %s3, %s638
        %p640 = scmp.lt.s32.totalorder %s23, 1
        %s641 = scalar_select %p640, %s23, 1
        %p642 = scmp.lt.s32.totalorder %s24, 1
        %s643 = scalar_select %p642, %s24, 1
        %s644 = smul.addr %s641, 2
        %s645 = sadd.s32 %s643, %s644
        %s646 = smul.addr %s645, 8
        %s647 = scalar_lea.vmem %s4, %s646
        %p648 = scmp.lt.s32.totalorder %s23, 1
        %s649 = scalar_select %p648, %s23, 1
        %p650 = scmp.lt.s32.totalorder %s24, 1
        %s651 = scalar_select %p650, %s24, 1
        %s652 = smul.addr %s649, 2
        %s653 = sadd.s32 %s651, %s652
        %s654 = smul.addr %s653, 8
        %s655 = scalar_lea.vmem %s5, %s654
        // Predicated region
        $region41: #{mel_mlp_estimator.2} parent=31 // pred_check
          %p656 = pneg %p119
        $region42: #{mel_mlp_estimator.2} parent=31 // pred_check_branch
          %658 = sbr.rel (%p656) target = $region44
        $region43: #{mel_mlp_estimator.2} parent=31 // pred_region
          _
        $region44: #{mel_mlp_estimator.2} parent=31 // pred_fallthru
          _
        // Predicated region
        $region45: #{mel_mlp_estimator.2} parent=31 // pred_check
          %p659 = pneg %p147
        $region46: #{mel_mlp_estimator.2} parent=31 // pred_check_branch
          %661 = sbr.rel (%p659) target = $region48
        $region47: #{mel_mlp_estimator.2} parent=31 // pred_region
          _
        $region48: #{mel_mlp_estimator.2} parent=31 // pred_fallthru
          _
        // Predicated region
        $region49: #{mel_mlp_estimator.2} parent=31 // pred_check
          %p662 = pneg %p175
        $region50: #{mel_mlp_estimator.2} parent=31 // pred_check_branch
          %664 = sbr.rel (%p662) target = $region52
        $region51: #{mel_mlp_estimator.2} parent=31 // pred_region
          _
        $region52: #{mel_mlp_estimator.2} parent=31 // pred_fallthru
          _
      $region32: #{mel_mlp_estimator.2} parent=5 // pred_fallthru
        _
      %p665 = scmp.le.s32.totalorder 2, %s14
      // Predicated region
      $region53: #{mel_mlp_estimator.2} parent=5 // pred_check
        %p666 = pneg %p665
      $region54: #{mel_mlp_estimator.2} parent=5 // pred_check_branch
        %668 = sbr.rel (%p666) target = $region56
      $region55: #{mel_mlp_estimator.2} parent=5 // pred_region
        %s669 = ssub.s32 %s14, 2
        // Predicated region
        $region57: #{mel_mlp_estimator.2} parent=55 // pred_check
          %p670 = pneg %p125
        $region58: #{mel_mlp_estimator.2} parent=55 // pred_check_branch
          %672 = sbr.rel (%p670) target = $region60
        $region59: #{mel_mlp_estimator.2} parent=55 // pred_region
          %p673 = scmp.lt.s32.totalorder %s25, 1
          %s674 = scalar_select %p673, %s25, 1
          %p675 = scmp.lt.s32.totalorder %s26, 1
          %s676 = scalar_select %p675, %s26, 1
          %s677 = smul.addr %s674, 2
          %s678 = sadd.s32 %s676, %s677
          %s679 = smul.addr %s678, 4
          %s680 = scalar_lea.vmem %s3, %s679
        $region60: #{mel_mlp_estimator.2} parent=55 // pred_fallthru
          _
        // Predicated region
        $region61: #{mel_mlp_estimator.2} parent=55 // pred_check
          %p681 = pneg %p153
        $region62: #{mel_mlp_estimator.2} parent=55 // pred_check_branch
          %683 = sbr.rel (%p681) target = $region64
        $region63: #{mel_mlp_estimator.2} parent=55 // pred_region
          %p684 = scmp.lt.s32.totalorder %s25, 1
          %s685 = scalar_select %p684, %s25, 1
          %p686 = scmp.lt.s32.totalorder %s26, 1
          %s687 = scalar_select %p686, %s26, 1
          %s688 = smul.addr %s685, 2
          %s689 = sadd.s32 %s687, %s688
          %s690 = smul.addr %s689, 8
          %s691 = scalar_lea.vmem %s4, %s690
        $region64: #{mel_mlp_estimator.2} parent=55 // pred_fallthru
          _
        // Predicated region
        $region65: #{mel_mlp_estimator.2} parent=55 // pred_check
          %p692 = pneg %p181
        $region66: #{mel_mlp_estimator.2} parent=55 // pred_check_branch
          %694 = sbr.rel (%p692) target = $region68
        $region67: #{mel_mlp_estimator.2} parent=55 // pred_region
          %p695 = scmp.lt.s32.totalorder %s25, 1
          %s696 = scalar_select %p695, %s25, 1
          %p697 = scmp.lt.s32.totalorder %s26, 1
          %s698 = scalar_select %p697, %s26, 1
          %s699 = smul.addr %s696, 2
          %s700 = sadd.s32 %s698, %s699
          %s701 = smul.addr %s700, 8
          %s702 = scalar_lea.vmem %s5, %s701
        $region68: #{mel_mlp_estimator.2} parent=55 // pred_fallthru
          _
      $region56: #{mel_mlp_estimator.2} parent=5 // pred_fallthru
        _
    $region6: #{mel_mlp_estimator.2} parent=1 // loop_footer
      %s18 = sadd.s32 1, %s14
    $region7: #{mel_mlp_estimator.2} parent=1 // loop_footer_branch
      %13 = sbr.rel target = $region3
    $region8: #{mel_mlp_estimator.2} parent=1 // loop_exit
      _
    %703 = vsyncpa [#allocation3], 1
    %s704 = scalar_lea.sflag [#allocation3], 1
    %705 = vsyncpa %s704, 1
    %706 = vsyncpa [#allocation5], 1

// kernel: mel_mlp_estimator.3
$region0: #{mel_mlp_estimator.3}
  #allocation0 [shape = 'u32[]', space=smem, size = 0x4, offset = 0x4, fixed_abs, tag = 'smem constant byte address 0x4 - core index']
  #allocation1 [shape = 'u32[72,128]{1,0:T(1,128)}', space=vmem, size = 0x9000, scoped, tag = 'internal scratch']
  %s0 = inlined_call_operand.vmem [shape: bf16[2,16,128], index: 0, kind: input, shape index: {}]
  %s1 = inlined_call_operand.vmem [shape: bf16[128,32], index: 1, kind: input, shape index: {}]
  %s2 = inlined_call_operand.vmem [shape: bf16[32,32], index: 2, kind: input, shape index: {}]
  %s3 = inlined_call_operand.vmem [shape: bf16[32,32], index: 3, kind: input, shape index: {}]
  %s4 = inlined_call_operand.vmem [shape: bf16[32,128], index: 4, kind: input, shape index: {}]
  %s5 = inlined_call_operand.vmem [shape: f32[9,32], index: 5, kind: input, shape index: {}]
  %s6 = inlined_call_operand.vmem [shape: f32[1,128], index: 6, kind: input, shape index: {}]
  %s7 = inlined_call_operand.vmem [shape: bf16[2,16,128], index: 7, kind: output, shape index: {}]
  %s8 = sld [smem:[#allocation0]]
  $region61: #{mel_mlp_estimator.3} parent=0
    _
  %s10 = ssub.s32 1, %s8
  %s11 = scalar_select 0, %s10, %s8
  loop: start=0, step=1, limit=6
  $region2: #{mel_mlp_estimator.3} parent=0 // loop_pre_header
    _
  $region3: #{mel_mlp_estimator.3} parent=0 // loop_header
    %s13 = sphi 0, %s17
    %p14 = scmp.ge.s32.totalorder %s13, 6
    %s20 = sphi 0, %s32
    %s21 = sphi 0, %s28
    %s22 = sphi 0, %s20
    %s23 = sphi 0, %s21
    %s24 = sphi 0, %s22
    %s25 = sphi 0, %s23
    %s37 = sphi 0, %s39
    %s40 = sphi 0, %s37
    %s41 = sphi 0, %s40
    %s57 = sphi 0, %s41
    %s61 = sphi 0, %s61
    %s63 = sphi 0, %s61
    %s64 = sphi 0, %s63
    %s78 = sphi 0, %s64
    %s82 = sphi 0, %s82
    %s84 = sphi 0, %s82
    %s85 = sphi 0, %s84
    %s99 = sphi 0, %s85
    %s103 = sphi 0, %s103
    %s105 = sphi 0, %s103
    %s106 = sphi 0, %s105
    %s120 = sphi 0, %s106
    %s124 = sphi 0, %s124
    %s126 = sphi 0, %s124
    %s127 = sphi 0, %s126
    %s141 = sphi 0, %s127
    %s145 = sphi 0, %s145
    %s147 = sphi 0, %s145
    %s148 = sphi 0, %s147
    %s162 = sphi 0, %s148
    %s166 = sphi 0, %s166
    %s168 = sphi 0, %s166
    %s169 = sphi 0, %s168
    %s183 = sphi 0, %s169
    %s191 = sphi 0, %s193
    %s194 = sphi 0, %s191
    %s195 = sphi 0, %s194
    %s211 = sphi 0, %s195
  $region4: #{mel_mlp_estimator.3} parent=0 // loop_header_branch
    %16 = sbr.rel (%p14) target = $region8
  $region5: #{mel_mlp_estimator.3} parent=0 // loop_body
    %s18 = ssub.s32 %s13, 1
    %s19 = ssub.s32 %s13, 2
    %s26 = sadd.s32 1, %s21
    %p27 = scmp.ge.s32.totalorder %s26, 2
    %s28 = scalar_select %p27, 0, %s26
    %s29 = sadd.s32 1, %s20
    %s30 = scalar_select %p27, %s29, %s20
    %p31 = scmp.ge.s32.totalorder %s30, 2
    %s32 = scalar_select %p31, 0, %s30
    %s33 = ssub.s32 %s20, %s32
    %s34 = ssub.s32 %s21, %s28
    %s35 = sor.u32 %s33, %s34
    %p36 = scmp.eq.s32.totalorder %s35, 0
    %s38 = sadd.s32 %s37, 1
    %s39 = scalar_select %p36, %s37, %s38
    %p42 = pneg %p36
    %p43 = scmp.eq.s32.totalorder %s13, 3
    %p44 = por %p42, %p43
    %p45 = scmp.ne.s32.totalorder %s37, %s40
    %p46 = scmp.eq.s32.totalorder %s13, 0
    %p47 = por %p45, %p46
    %p48 = scmp.ne.s32.totalorder %s37, %s40
    %p49 = scmp.eq.s32.totalorder %s18, 3
    %p50 = por %p48, %p49
    %p51 = scmp.ne.s32.totalorder %s40, %s41
    %p52 = scmp.eq.s32.totalorder %s18, 0
    %p53 = por %p51, %p52
    %p54 = scmp.ne.s32.totalorder %s40, %s41
    %p55 = scmp.eq.s32.totalorder %s19, 3
    %p56 = por %p54, %p55
    %p58 = scmp.ne.s32.totalorder %s41, %s57
    %p59 = scmp.eq.s32.totalorder %s19, 0
    %p60 = por %p58, %p59
    %s62 = sadd.s32 %s61, 1
    %p65 = scmp.eq.s32.totalorder %s13, 3
    %p66 = scmp.ne.s32.totalorder %s61, %s63
    %p67 = scmp.eq.s32.totalorder %s13, 0
    %p68 = por %p66, %p67
    %p69 = scmp.ne.s32.totalorder %s61, %s63
    %p70 = scmp.eq.s32.totalorder %s18, 3
    %p71 = por %p69, %p70
    %p72 = scmp.ne.s32.totalorder %s63, %s64
    %p73 = scmp.eq.s32.totalorder %s18, 0
    %p74 = por %p72, %p73
    %p75 = scmp.ne.s32.totalorder %s63, %s64
    %p76 = scmp.eq.s32.totalorder %s19, 3
    %p77 = por %p75, %p76
    %p79 = scmp.ne.s32.totalorder %s64, %s78
    %p80 = scmp.eq.s32.totalorder %s19, 0
    %p81 = por %p79, %p80
    %s83 = sadd.s32 %s82, 1
    %p86 = scmp.eq.s32.totalorder %s13, 3
    %p87 = scmp.ne.s32.totalorder %s82, %s84
    %p88 = scmp.eq.s32.totalorder %s13, 0
    %p89 = por %p87, %p88
    %p90 = scmp.ne.s32.totalorder %s82, %s84
    %p91 = scmp.eq.s32.totalorder %s18, 3
    %p92 = por %p90, %p91
    %p93 = scmp.ne.s32.totalorder %s84, %s85
    %p94 = scmp.eq.s32.totalorder %s18, 0
    %p95 = por %p93, %p94
    %p96 = scmp.ne.s32.totalorder %s84, %s85
    %p97 = scmp.eq.s32.totalorder %s19, 3
    %p98 = por %p96, %p97
    %p100 = scmp.ne.s32.totalorder %s85, %s99
    %p101 = scmp.eq.s32.totalorder %s19, 0
    %p102 = por %p100, %p101
    %s104 = sadd.s32 %s103, 1
    %p107 = scmp.eq.s32.totalorder %s13, 3
    %p108 = scmp.ne.s32.totalorder %s103, %s105
    %p109 = scmp.eq.s32.totalorder %s13, 0
    %p110 = por %p108, %p109
    %p111 = scmp.ne.s32.totalorder %s103, %s105
    %p112 = scmp.eq.s32.totalorder %s18, 3
    %p113 = por %p111, %p112
    %p114 = scmp.ne.s32.totalorder %s105, %s106
    %p115 = scmp.eq.s32.totalorder %s18, 0
    %p116 = por %p114, %p115
    %p117 = scmp.ne.s32.totalorder %s105, %s106
    %p118 = scmp.eq.s32.totalorder %s19, 3
    %p119 = por %p117, %p118
    %p121 = scmp.ne.s32.totalorder %s106, %s120
    %p122 = scmp.eq.s32.totalorder %s19, 0
    %p123 = por %p121, %p122
    %s125 = sadd.s32 %s124, 1
    %p128 = scmp.eq.s32.totalorder %s13, 3
    %p129 = scmp.ne.s32.totalorder %s124, %s126
    %p130 = scmp.eq.s32.totalorder %s13, 0
    %p131 = por %p129, %p130
    %p132 = scmp.ne.s32.totalorder %s124, %s126
    %p133 = scmp.eq.s32.totalorder %s18, 3
    %p134 = por %p132, %p133
    %p135 = scmp.ne.s32.totalorder %s126, %s127
    %p136 = scmp.eq.s32.totalorder %s18, 0
    %p137 = por %p135, %p136
    %p138 = scmp.ne.s32.totalorder %s126, %s127
    %p139 = scmp.eq.s32.totalorder %s19, 3
    %p140 = por %p138, %p139
    %p142 = scmp.ne.s32.totalorder %s127, %s141
    %p143 = scmp.eq.s32.totalorder %s19, 0
    %p144 = por %p142, %p143
    %s146 = sadd.s32 %s145, 1
    %p149 = scmp.eq.s32.totalorder %s13, 3
    %p150 = scmp.ne.s32.totalorder %s145, %s147
    %p151 = scmp.eq.s32.totalorder %s13, 0
    %p152 = por %p150, %p151
    %p153 = scmp.ne.s32.totalorder %s145, %s147
    %p154 = scmp.eq.s32.totalorder %s18, 3
    %p155 = por %p153, %p154
    %p156 = scmp.ne.s32.totalorder %s147, %s148
    %p157 = scmp.eq.s32.totalorder %s18, 0
    %p158 = por %p156, %p157
    %p159 = scmp.ne.s32.totalorder %s147, %s148
    %p160 = scmp.eq.s32.totalorder %s19, 3
    %p161 = por %p159, %p160
    %p163 = scmp.ne.s32.totalorder %s148, %s162
    %p164 = scmp.eq.s32.totalorder %s19, 0
    %p165 = por %p163, %p164
    %s167 = sadd.s32 %s166, 1
    %p170 = scmp.eq.s32.totalorder %s13, 3
    %p171 = scmp.ne.s32.totalorder %s166, %s168
    %p172 = scmp.eq.s32.totalorder %s13, 0
    %p173 = por %p171, %p172
    %p174 = scmp.ne.s32.totalorder %s166, %s168
    %p175 = scmp.eq.s32.totalorder %s18, 3
    %p176 = por %p174, %p175
    %p177 = scmp.ne.s32.totalorder %s168, %s169
    %p178 = scmp.eq.s32.totalorder %s18, 0
    %p179 = por %p177, %p178
    %p180 = scmp.ne.s32.totalorder %s168, %s169
    %p181 = scmp.eq.s32.totalorder %s19, 3
    %p182 = por %p180, %p181
    %p184 = scmp.ne.s32.totalorder %s169, %s183
    %p185 = scmp.eq.s32.totalorder %s19, 0
    %p186 = por %p184, %p185
    %s187 = ssub.s32 %s20, %s32
    %s188 = ssub.s32 %s21, %s28
    %s189 = sor.u32 %s187, %s188
    %p190 = scmp.eq.s32.totalorder %s189, 0
    %s192 = sadd.s32 %s191, 1
    %s193 = scalar_select %p190, %s191, %s192
    %p196 = pneg %p190
    %p197 = scmp.eq.s32.totalorder %s13, 3
    %p198 = por %p196, %p197
    %p199 = scmp.ne.s32.totalorder %s191, %s194
    %p200 = scmp.eq.s32.totalorder %s13, 0
    %p201 = por %p199, %p200
    %p202 = scmp.ne.s32.totalorder %s191, %s194
    %p203 = scmp.eq.s32.totalorder %s18, 3
    %p204 = por %p202, %p203
    %p205 = scmp.ne.s32.totalorder %s194, %s195
    %p206 = scmp.eq.s32.totalorder %s18, 0
    %p207 = por %p205, %p206
    %p208 = scmp.ne.s32.totalorder %s194, %s195
    %p209 = scmp.eq.s32.totalorder %s19, 3
    %p210 = por %p208, %p209
    %p212 = scmp.ne.s32.totalorder %s195, %s211
    %p213 = scmp.eq.s32.totalorder %s19, 0
    %p214 = por %p212, %p213
    %p215 = scmp.le.s32.totalorder 1, %s13
    %p216 = scmp.lt.s32.totalorder %s13, 5
    %p217 = pnand %p215, %p216
    %p218 = pneg %p217
    // Predicated region
    $region9: #{mel_mlp_estimator.3} parent=5 // pred_check
      _
    $region10: #{mel_mlp_estimator.3} parent=5 // pred_check_branch
      %220 = sbr.rel (%p217) target = $region12
    $region11: #{mel_mlp_estimator.3} parent=5 // pred_region
      %s221 = ssub.s32 %s13, 1
      // Predicated region
      $region13: #{mel_mlp_estimator.3} parent=11 // pred_check
        %p222 = pneg %p74
      $region14: #{mel_mlp_estimator.3} parent=11 // pred_check_branch
        %224 = sbr.rel (%p222) target = $region16
      $region15: #{mel_mlp_estimator.3} parent=11 // pred_region
        _
      $region16: #{mel_mlp_estimator.3} parent=11 // pred_fallthru
        _
      // Predicated region
      $region17: #{mel_mlp_estimator.3} parent=11 // pred_check
        %p225 = pneg %p95
      $region18: #{mel_mlp_estimator.3} parent=11 // pred_check_branch
        %227 = sbr.rel (%p225) target = $region20
      $region19: #{mel_mlp_estimator.3} parent=11 // pred_region
        _
      $region20: #{mel_mlp_estimator.3} parent=11 // pred_fallthru
        _
      // Predicated region
      $region21: #{mel_mlp_estimator.3} parent=11 // pred_check
        %p228 = pneg %p116
      $region22: #{mel_mlp_estimator.3} parent=11 // pred_check_branch
        %230 = sbr.rel (%p228) target = $region24
      $region23: #{mel_mlp_estimator.3} parent=11 // pred_region
        _
      $region24: #{mel_mlp_estimator.3} parent=11 // pred_fallthru
        _
      // Predicated region
      $region25: #{mel_mlp_estimator.3} parent=11 // pred_check
        %p231 = pneg %p137
      $region26: #{mel_mlp_estimator.3} parent=11 // pred_check_branch
        %233 = sbr.rel (%p231) target = $region28
      $region27: #{mel_mlp_estimator.3} parent=11 // pred_region
        _
      $region28: #{mel_mlp_estimator.3} parent=11 // pred_fallthru
        _
      // Predicated region
      $region29: #{mel_mlp_estimator.3} parent=11 // pred_check
        %p234 = pneg %p158
      $region30: #{mel_mlp_estimator.3} parent=11 // pred_check_branch
        %236 = sbr.rel (%p234) target = $region32
      $region31: #{mel_mlp_estimator.3} parent=11 // pred_region
        _
      $region32: #{mel_mlp_estimator.3} parent=11 // pred_fallthru
        _
      // Predicated region
      $region33: #{mel_mlp_estimator.3} parent=11 // pred_check
        %p237 = pneg %p179
      $region34: #{mel_mlp_estimator.3} parent=11 // pred_check_branch
        %239 = sbr.rel (%p237) target = $region36
      $region35: #{mel_mlp_estimator.3} parent=11 // pred_region
        _
      $region36: #{mel_mlp_estimator.3} parent=11 // pred_fallthru
        _
    $region12: #{mel_mlp_estimator.3} parent=5 // pred_fallthru
      _
    %p240 = scmp.lt.s32.totalorder %s13, 4
    // Predicated region
    $region37: #{mel_mlp_estimator.3} parent=5 // pred_check
      %p241 = pneg %p240
    $region38: #{mel_mlp_estimator.3} parent=5 // pred_check_branch
      %243 = sbr.rel (%p241) target = $region40
    $region39: #{mel_mlp_estimator.3} parent=5 // pred_region
      // Predicated region
      $region41: #{mel_mlp_estimator.3} parent=39 // pred_check
        %p244 = pneg %p47
      $region42: #{mel_mlp_estimator.3} parent=39 // pred_check_branch
        %246 = sbr.rel (%p244) target = $region44
      $region43: #{mel_mlp_estimator.3} parent=39 // pred_region
        %p247 = scmp.lt.s32.totalorder %s20, 1
        %s248 = scalar_select %p247, %s20, 1
        %p249 = scmp.lt.s32.totalorder %s21, 1
        %s250 = scalar_select %p249, %s21, 1
        %s251 = smul.addr %s248, 2
        %s252 = sadd.s32 %s250, %s251
        %s253 = smul.addr %s252, 4
        %s254 = scalar_lea.vmem %s0, %s253
      $region44: #{mel_mlp_estimator.3} parent=39 // pred_fallthru
        _
    $region40: #{mel_mlp_estimator.3} parent=5 // pred_fallthru
      _
    %p255 = scmp.le.s32.totalorder 1, %s13
    %p256 = scmp.lt.s32.totalorder %s13, 5
    %p257 = pnand %p255, %p256
    %p258 = pneg %p257
    // Predicated region
    $region45: #{mel_mlp_estimator.3} parent=5 // pred_check
      _
    $region46: #{mel_mlp_estimator.3} parent=5 // pred_check_branch
      %260 = sbr.rel (%p257) target = $region48
    $region47: #{mel_mlp_estimator.3} parent=5 // pred_region
      %s261 = ssub.s32 %s13, 1
      %p262 = scmp.lt.s32.totalorder %s22, 1
      %s263 = scalar_select %p262, %s22, 1
      %p264 = scmp.lt.s32.totalorder %s23, 1
      %s265 = scalar_select %p264, %s23, 1
      %s266 = smul.addr %s263, 2
      %s267 = sadd.s32 %s265, %s266
      %s268 = smul.addr %s267, 4
      %s269 = scalar_lea.vmem %s0, %s268
      %p270 = pneg %p53
      %p271 = pneg %p50
      %p272 = pneg %p74
      %p273 = pneg %p71
      %p274 = pneg %p95
      %p275 = pneg %p92
      %p276 = pneg %p116
      %p277 = pneg %p113
      %p278 = pneg %p137
      %p279 = pneg %p134
      %p280 = pneg %p158
      %p281 = pneg %p155
      %p282 = pneg %p179
      %p283 = pneg %p176
      %p284 = pneg %p207
      %p285 = pneg %p204
      %p286 = scmp.lt.s32.totalorder %s22, 1
      %s287 = scalar_select %p286, %s22, 1
      %p288 = scmp.lt.s32.totalorder %s23, 1
      %s289 = scalar_select %p288, %s23, 1
      %s290 = smul.addr %s287, 2
      %s291 = sadd.s32 %s289, %s290
      %s292 = smul.addr %s291, 4
      %s293 = scalar_lea.vmem %s7, %s292
      %p294 = scmp.lt.s32.totalorder %s22, 1
      %s295 = scalar_select %p294, %s22, 1
      %p296 = scmp.lt.s32.totalorder %s23, 1
      %s297 = scalar_select %p296, %s23, 1
      %s298 = smul.addr %s295, 2
      %s299 = sadd.s32 %s297, %s298
      %s300 = smul.addr %s299, 4
      %s301 = scalar_lea.vmem %s0, %s300
      %p302 = scmp.lt.s32.totalorder %s22, 1
      %s303 = scalar_select %p302, %s22, 1
      %p304 = scmp.lt.s32.totalorder %s23, 1
      %s305 = scalar_select %p304, %s23, 1
      %s306 = smul.addr %s303, 2
      %s307 = sadd.s32 %s305, %s306
      %s308 = smul.addr %s307, 4
      %s309 = scalar_lea.vmem %s7, %s308
      %v311 = vld [vmem:[%s301] sm:$0xf]
      %v312 = vld [vmem:[%s5] sm:$0x1]
      %v313 = vld [vmem:[%s5 + $0x1] sm:$0x1]
      %v314 = vld [vmem:[%s5 + $0x2] sm:$0x1]
      %v315 = vld [vmem:[%s1] sm:$0xf]
      %v316 = vld [vmem:[%s1 + $0x4] sm:$0xf]
      %v317 = vld [vmem:[%s1 + $0x8] sm:$0xf]
      %v318 = vld [vmem:[%s1 + $0xc] sm:$0xf]
      %v319 = vld [vmem:[%s1 + $0x10] sm:$0xf]
      %v320 = vld [vmem:[%s1 + $0x14] sm:$0xf]
      %v321 = vld [vmem:[%s1 + $0x18] sm:$0xf]
      %v322 = vld [vmem:[%s1 + $0x1c] sm:$0xf]
      %v323 = vld [vmem:[%s1 + $0x20] sm:$0xf]
      %v324 = vld [vmem:[%s1 + $0x24] sm:$0xf]
      %v325 = vld [vmem:[%s1 + $0x28] sm:$0xf]
      %v326 = vld [vmem:[%s1 + $0x2c] sm:$0xf]
      %v327 = vld [vmem:[%s1 + $0x30] sm:$0xf]
      %v328 = vld [vmem:[%s1 + $0x34] sm:$0xf]
      %v329 = vld [vmem:[%s1 + $0x38] sm:$0xf]
      %v330 = vld [vmem:[%s1 + $0x3c] sm:$0xf]
      %v331 = vperm.slane %v312, 0
      %v348 = vunpack.c.l.b16 %v315
      %v349 = vunpack.c.l.b16 %v316
      %v350 = vunpack.c.l.b16 %v317
      %v351 = vunpack.c.l.b16 %v318
      %v352 = vunpack.c.l.b16 %v319
      %v353 = vunpack.c.l.b16 %v320
      %v354 = vunpack.c.l.b16 %v321
      %v355 = vunpack.c.l.b16 %v322
      %v356 = vunpack.c.l.b16 %v323
      %v357 = vunpack.c.l.b16 %v324
      %v358 = vunpack.c.l.b16 %v325
      %v359 = vunpack.c.l.b16 %v326
      %v360 = vunpack.c.l.b16 %v327
      %v361 = vunpack.c.l.b16 %v328
      %v362 = vunpack.c.l.b16 %v329
      %v363 = vunpack.c.l.b16 %v330
      %v364 = vpack.c.b16 %v349, %v348
      %v365 = vpack.c.b16 %v351, %v350
      %v366 = vpack.c.b16 %v353, %v352
      %v367 = vpack.c.b16 %v355, %v354
      %v368 = vpack.c.b16 %v357, %v356
      %v369 = vpack.c.b16 %v359, %v358
      %v370 = vpack.c.b16 %v361, %v360
      %v371 = vpack.c.b16 %v363, %v362
      %380 = vmatpush.bf16.msra.mxu0 %v371
      %381 = vmatpush.bf16.msra.mxu0 %v370
      %382 = vmatpush.bf16.msra.mxu0 %v369
      %383 = vmatpush.bf16.msra.mxu0 %v368
      %384 = vmatpush.bf16.msra.mxu0 %v367
      %385 = vmatpush.bf16.msra.mxu0 %v366
      %386 = vmatpush.bf16.msra.mxu0 %v365
      %387 = vmatpush.bf16.msra.mxu0 %v364
      %388 = vmatmul.bf16.gmra.mxu0 %v311
      %v389 = vpop.f32.mrf.mxu0
      %v390 = vadd.f32 %v331, %v389
      %v391 = vpop.f32.mrf.mxu0
      %392 = vdwg.mxu0
      %vm393 = vcmask 261120
      %v394 = vsel %vm393, %v390, 0.0
      %395 = vadd.xlane.f32.xlu0 %v394
      %v396 = vpop.xlane.xlu0 %395
      %v397 = vrcp.pop 32.0
      %v398 = vmul.f32 32.0, %v397
      %v399 = vsub.f32 1.0, %v398
      %v400 = vmul.f32 %v397, %v399
      %v401 = vadd.f32 %v397, %v400
      %vm402 = vweird.f32 %v397
      %v403 = vsel %vm402, %v397, %v401
      %v404 = vmul.f32 %v396, %v403
      %v405 = vsub.f32 %v390, %v404
      %v406 = vmul.f32 %v405, %v405
      %v407 = vsel %vm393, %v406, 0.0
      %408 = vadd.xlane.f32.xlu0 %v407
      %v409 = vpop.xlane.xlu0 %408
      %v410 = vmul.f32 %v409, %v403
      %v411 = vadd.f32 %v410, 1e-05
      %v412 = vrsqrt.pop %v411
      %v413 = vmul.f32 %v412, %v411
      %v414 = vmul.f32 %v413, %v412
      %v415 = vmul.f32 0.5, %v414
      %v416 = vsub.f32 1.5, %v415
      %v417 = vmul.f32 %v412, %v416
      %vm418 = vweird.f32 %v411
      %vm419 = vweird.f32 %v412
      %vm420 = vmor %vm418, %vm419
      %v421 = vsel %vm420, %v412, %v417
      %v422 = vmul.f32 %v405, %v421
      %v423 = vperm.slane %v313, 0
      %v424 = vmul.f32 %v422, %v423
      %v425 = vperm.slane %v314, 0
      %v426 = vadd.f32 %v424, %v425
      %v427 = vmul.f32 %v426, 0.01
      %v428 = vmax.f32 %v426, %v427
      %v429 = vpack.c.bf16 %v428, %v428
      %v430 = vld [vmem:[%s5 + $0x3] sm:$0x1]
      %v431 = vld [vmem:[%s5 + $0x4] sm:$0x1]
      %v432 = vld [vmem:[%s5 + $0x5] sm:$0x1]
      %v433 = vld [vmem:[%s2] sm:$0xf]
      %v434 = vld [vmem:[%s2 + $0x4] sm:$0xf]
      %v435 = vld [vmem:[%s2 + $0x8] sm:$0xf]
      %v436 = vld [vmem:[%s2 + $0xc] sm:$0xf]
      %v437 = vperm.slane %v430, 0
      %v442 = vunpack.c.l.b16 %v433
      %v443 = vunpack.c.l.b16 %v434
      %v444 = vunpack.c.l.b16 %v435
      %v445 = vunpack.c.l.b16 %v436
      %v446 = vpack.c.b16 %v443, %v442
      %v447 = vpack.c.b16 %v445, %v444
      %v451 = vsel %vm393, %v429, 0
      %453 = vmatpush.bf16.msra.mxu0 0
      %454 = vmatpush.bf16.msra.mxu0 0
      %455 = vmatpush.bf16.msra.mxu0 0
      %456 = vmatpush.bf16.msra.mxu0 0
      %457 = vmatpush.bf16.msra.mxu0 0
      %458 = vmatpush.bf16.msra.mxu0 0
      %459 = vmatpush.bf16.msra.mxu0 %v447
      %460 = vmatpush.bf16.msra.mxu0 %v446
      %461 = vmatmul.bf16.gmra.mxu0 %v451
      %v462 = vpop.f32.mrf.mxu0
      %v463 = vadd.f32 %v437, %v462
      %v464 = vpop.f32.mrf.mxu0
      %465 = vdwg.mxu0
      %v466 = vsel %vm393, %v463, 0.0
      %467 = vadd.xlane.f32.xlu0 %v466
      %v468 = vpop.xlane.xlu0 %467
      %v469 = vmul.f32 %v468, %v403
      %v470 = vsub.f32 %v463, %v469
      %v471 = vmul.f32 %v470, %v470
      %v472 = vsel %vm393, %v471, 0.0
      %473 = vadd.xlane.f32.xlu0 %v472
      %v474 = vpop.xlane.xlu0 %473
      %v475 = vmul.f32 %v474, %v403
      %v476 = vadd.f32 %v475, 1e-05
      %v477 = vrsqrt.pop %v476
      %v478 = vmul.f32 %v477, %v476
      %v479 = vmul.f32 %v478, %v477
      %v480 = vmul.f32 0.5, %v479
      %v481 = vsub.f32 1.5, %v480
      %v482 = vmul.f32 %v477, %v481
      %vm483 = vweird.f32 %v476
      %vm484 = vweird.f32 %v477
      %vm485 = vmor %vm483, %vm484
      %v486 = vsel %vm485, %v477, %v482
      %v487 = vmul.f32 %v470, %v486
      %v488 = vperm.slane %v431, 0
      %v489 = vmul.f32 %v487, %v488
      %v490 = vperm.slane %v432, 0
      %v491 = vadd.f32 %v489, %v490
      %v492 = vmul.f32 %v491, 0.01
      %v493 = vmax.f32 %v491, %v492
      %v494 = vpack.c.bf16 %v493, %v493
      %v495 = vld [vmem:[%s5 + $0x6] sm:$0x1]
      %v496 = vld [vmem:[%s5 + $0x7] sm:$0x1]
      %v497 = vld [vmem:[%s5 + $0x8] sm:$0x1]
      %v498 = vld [vmem:[%s3] sm:$0xf]
      %v499 = vld [vmem:[%s3 + $0x4] sm:$0xf]
      %v500 = vld [vmem:[%s3 + $0x8] sm:$0xf]
      %v501 = vld [vmem:[%s3 + $0xc] sm:$0xf]
      %v502 = vperm.slane %v495, 0
      %v507 = vunpack.c.l.b16 %v498
      %v508 = vunpack.c.l.b16 %v499
      %v509 = vunpack.c.l.b16 %v500
      %v510 = vunpack.c.l.b16 %v501
      %v511 = vpack.c.b16 %v508, %v507
      %v512 = vpack.c.b16 %v510, %v509
      %v516 = vsel %vm393, %v494, 0
      %518 = vmatpush.bf16.msra.mxu0 0
      %519 = vmatpush.bf16.msra.mxu0 0
      %520 = vmatpush.bf16.msra.mxu0 0
      %521 = vmatpush.bf16.msra.mxu0 0
      %522 = vmatpush.bf16.msra.mxu0 0
      %523 = vmatpush.bf16.msra.mxu0 0
      %524 = vmatpush.bf16.msra.mxu0 %v512
      %525 = vmatpush.bf16.msra.mxu0 %v511
      %526 = vmatmul.bf16.gmra.mxu0 %v516
      %v527 = vpop.f32.mrf.mxu0
      %v528 = vadd.f32 %v502, %v527
      %v529 = vpop.f32.mrf.mxu0
      %530 = vdwg.mxu0
      %v531 = vsel %vm393, %v528, 0.0
      %532 = vadd.xlane.f32.xlu0 %v531
      %v533 = vpop.xlane.xlu0 %532
      %v534 = vmul.f32 %v533, %v403
      %v535 = vsub.f32 %v528, %v534
      %v536 = vmul.f32 %v535, %v535
      %v537 = vsel %vm393, %v536, 0.0
      %538 = vadd.xlane.f32.xlu0 %v537
      %v539 = vpop.xlane.xlu0 %538
      %v540 = vmul.f32 %v539, %v403
      %v541 = vadd.f32 %v540, 1e-05
      %v542 = vrsqrt.pop %v541
      %v543 = vmul.f32 %v542, %v541
      %v544 = vmul.f32 %v543, %v542
      %v545 = vmul.f32 0.5, %v544
      %v546 = vsub.f32 1.5, %v545
      %v547 = vmul.f32 %v542, %v546
      %vm548 = vweird.f32 %v541
      %vm549 = vweird.f32 %v542
      %vm550 = vmor %vm548, %vm549
      %v551 = vsel %vm550, %v542, %v547
      %v552 = vmul.f32 %v535, %v551
      %v553 = vperm.slane %v496, 0
      %v554 = vmul.f32 %v552, %v553
      %v555 = vperm.slane %v497, 0
      %v556 = vadd.f32 %v554, %v555
      %v557 = vmul.f32 %v556, 0.01
      %v558 = vmax.f32 %v556, %v557
      %v559 = vpack.c.bf16 %v558, %v558
      %v560 = vld [vmem:[%s4] sm:$0xf]
      %v561 = vld [vmem:[%s4 + $0x4] sm:$0xf]
      %v562 = vld [vmem:[%s4 + $0x8] sm:$0xf]
      %v563 = vld [vmem:[%s4 + $0xc] sm:$0xf]
      %v564 = vld [vmem:[%s6] sm:$0x1]
      %v566 = vperm.slane %v564, 0
      %v572 = vunpack.c.l.b16 %v560
      %v573 = vunpack.c.l.b16 %v561
      %v574 = vunpack.c.l.b16 %v562
      %v575 = vunpack.c.l.b16 %v563
      %v576 = vpack.c.b16 %v573, %v572
      %v577 = vpack.c.b16 %v575, %v574
      %v581 = vsel %vm393, %v559, 0
      %583 = vmatpush.bf16.msra.mxu0 0
      %584 = vmatpush.bf16.msra.mxu0 0
      %585 = vmatpush.bf16.msra.mxu0 0
      %586 = vmatpush.bf16.msra.mxu0 0
      %587 = vmatpush.bf16.msra.mxu0 0
      %588 = vmatpush.bf16.msra.mxu0 0
      %589 = vmatpush.bf16.msra.mxu0 %v577
      %590 = vmatpush.bf16.msra.mxu0 %v576
      %591 = vmatmul.bf16.gmra.mxu0 %v581
      %v592 = vpop.f32.mrf.mxu0
      %v593 = vadd.f32 %v566, %v592
      %v594 = vpop.f32.mrf.mxu0
      %595 = vdwg.mxu0
      %v596 = vxor.u32 %v593, 2147483648
      %v597 = vmul.f32 %v596, 1.442695
      %v598 = vpow.pop %v597
      %v599 = vadd.f32 %v598, 1.0
      %v600 = vrcp.pop %v599
      %v601 = vmul.f32 %v599, %v600
      %v602 = vsub.f32 1.0, %v601
      %v603 = vmul.f32 %v600, %v602
      %v604 = vadd.f32 %v600, %v603
      %vm605 = vweird.f32 %v599
      %vm606 = vweird.f32 %v600
      %vm607 = vmor %vm605, %vm606
      %v608 = vsel %vm607, %v600, %v604
      %v609 = vand.u32 2147483647, %v599
      %vm610 = vcmp.eq.f32.partialorder %v609, 8.507059e+37
      %v611 = vand.u32 %v599, 2147483648
      %v612 = vor.u32 1.1754944e-38, %v611
      %v613 = vsel %vm610, %v612, %v608
      %v614 = vmul.f32 1.0, %v613
      %v615 = vpack.c.bf16 %v614, %v614
      %616 = vst [vmem:[%s309] sm:$0xf] %v615
      %p617 = scmp.lt.s32.totalorder %s22, 1
      %s618 = scalar_select %p617, %s22, 1
      %p619 = scmp.lt.s32.totalorder %s23, 1
      %s620 = scalar_select %p619, %s23, 1
      %s621 = smul.addr %s618, 2
      %s622 = sadd.s32 %s620, %s621
      %s623 = smul.addr %s622, 4
      %s624 = scalar_lea.vmem %s7, %s623
      // Predicated region
      $region49: #{mel_mlp_estimator.3} parent=47 // pred_check
        %p625 = pneg %p204
      $region50: #{mel_mlp_estimator.3} parent=47 // pred_check_branch
        %627 = sbr.rel (%p625) target = $region52
      $region51: #{mel_mlp_estimator.3} parent=47 // pred_region
        _
      $region52: #{mel_mlp_estimator.3} parent=47 // pred_fallthru
        _
    $region48: #{mel_mlp_estimator.3} parent=5 // pred_fallthru
      _
    %p628 = scmp.le.s32.totalorder 2, %s13
    // Predicated region
    $region53: #{mel_mlp_estimator.3} parent=5 // pred_check
      %p629 = pneg %p628
    $region54: #{mel_mlp_estimator.3} parent=5 // pred_check_branch
      %631 = sbr.rel (%p629) target = $region56
    $region55: #{mel_mlp_estimator.3} parent=5 // pred_region
      %s632 = ssub.s32 %s13, 2
      // Predicated region
      $region57: #{mel_mlp_estimator.3} parent=55 // pred_check
        %p633 = pneg %p210
      $region58: #{mel_mlp_estimator.3} parent=55 // pred_check_branch
        %635 = sbr.rel (%p633) target = $region60
      $region59: #{mel_mlp_estimator.3} parent=55 // pred_region
        %p636 = scmp.lt.s32.totalorder %s24, 1
        %s637 = scalar_select %p636, %s24, 1
        %p638 = scmp.lt.s32.totalorder %s25, 1
        %s639 = scalar_select %p638, %s25, 1
        %s640 = smul.addr %s637, 2
        %s641 = sadd.s32 %s639, %s640
        %s642 = smul.addr %s641, 4
        %s643 = scalar_lea.vmem %s7, %s642
      $region60: #{mel_mlp_estimator.3} parent=55 // pred_fallthru
        _
    $region56: #{mel_mlp_estimator.3} parent=5 // pred_fallthru
      _
  $region6: #{mel_mlp_estimator.3} parent=0 // loop_footer
    %s17 = sadd.s32 1, %s13
  $region7: #{mel_mlp_estimator.3} parent=0 // loop_footer_branch
    %12 = sbr.rel target = $region3
  $region8: #{mel_mlp_estimator.3} parent=0 // loop_exit
    _

</llo_original>
